<compile_context>
chip_gen: v7x
topology: tpu7x:2x2x1
jax: 0.10.0
libtpu: 0.0.40
codegen_flags: <defaults>
</compile_context>

<pallas_src>
import functools

import jax
import jax.numpy as jnp
from jax.experimental import pallas as pl
from jax.experimental.pallas import tpu as pltpu


def _pick_row_tile(H, h, C, W, itemsize, target_bytes=1 << 20):
    """Rows per grid step: multiple of h, divides H, multiple of 8 (or == H)."""
    cands = [t for t in range(h, H + 1, h)
             if H % t == 0 and (t % 8 == 0 or t == H)]
    for t in cands:                       # ascending: smallest tile >= target
        if C * t * W * itemsize >= target_bytes:
            return t
    smaller = [t for t in cands if t < H]
    return smaller[-1] if smaller else H


def _pool_kernel(pw_ref, x_ref, pooled_ref, *, h, tph):
    # pw_ref:     (W, wf) patch-column pooling matrix (carries 1/(h*w) factor)
    # x_ref:      (1, C, th, W) NCHW row-tile, th = tph * h
    # pooled_ref: (1, tph, C, wf)
    pw = pw_ref[...]
    for q in range(tph):                                   # static, small
        base = q * h
        xs = x_ref[0, :, base:base + h, :].astype(jnp.float32)   # (C, h, W)
        rowsum = xs[:, 0, :]
        for j in range(1, h):                              # static, small
            rowsum = rowsum + xs[:, j, :]
        # pool the w-groups of columns with a 0/1 matmul: (C, W) @ (W, wf)
        pooled_ref[0, q] = jnp.dot(rowsum, pw,
                                   preferred_element_type=jnp.float32)


def _scale_kernel(w2_ref, pooled_ref, scale_ref, pad_ref, stk_ref, *, k, pad, C, P):
    # w2_ref:     (C, k*C) conv weight with w2[co, dk*C + ci] = W[co, ci, dk]
    # pooled_ref: (1, C, P) ;  scale_ref: (1, C, P)
    # pad_ref:    (C, P + 2*pad) f32 scratch ; stk_ref: (k*C, P) f32 scratch
    pad_ref[...] = jnp.zeros_like(pad_ref)
    pad_ref[:, pad:pad + P] = pooled_ref[0].astype(jnp.float32)
    padded = pad_ref[...]
    for dk in range(k):                                    # build (k*C, P) operand
        stk_ref[dk * C:(dk + 1) * C, :] = padded[:, dk:dk + P]
    # single fused MXU call instead of k accumulated matmuls
    conv = jnp.dot(w2_ref[...], stk_ref[...],
                   preferred_element_type=jnp.float32)     # (C, P)
    scale_ref[0] = jax.nn.sigmoid(conv)


def _rescale_kernel(ew_ref, scale_ref, x_ref, o_ref, *, h, tph):
    # ew_ref:    (wf, W) 0/1 patch-column expansion matrix
    # scale_ref: (1, tph, C, wf) per-patch gates for this row-tile
    # x_ref/o_ref: (1, C, th, W)
    ew = ew_ref[...]
    for q in range(tph):                                   # static, small
        m = jnp.dot(scale_ref[0, q], ew,
                    preferred_element_type=jnp.float32)    # (C, wf)@(wf, W) -> (C, W)
        base = q * h
        xs = x_ref[0, :, base:base + h, :].astype(jnp.float32)   # (C, h, W)
        o_ref[0, :, base:base + h, :] = (xs * m[:, None, :]).astype(o_ref.dtype)


@functools.partial(jax.jit, static_argnums=(2, 3))
def patch_spatial_attention(x, conv_w, h, w):
    """x: (B, C, H, W) NCHW; conv_w: (C, C, k) PyTorch Conv1d weight (no bias)."""
    B, C, H, W = x.shape
    hf, wf = H // h, W // w
    P = hf * wf
    k = conv_w.shape[-1]
    pad = (k - 1) // 2

    th = _pick_row_tile(H, h, C, W, x.dtype.itemsize)
    tph = th // h
    R = H // th

    # Small constant operands (negligible size).
    col = jnp.arange(W)
    grp = jnp.arange(wf)
    pw = ((col[:, None] // w) == grp[None, :]).astype(jnp.float32) / float(h * w)  # (W, wf)
    ew = (grp[:, None] == (col[None, :] // w)).astype(jnp.float32)                 # (wf, W)
    w2 = jnp.transpose(conv_w, (0, 2, 1)).reshape(C, k * C).astype(jnp.float32)    # (C, k*C)

    # ---- pass 1: per-patch average pool (reads x once) -> (B, hf, C, wf) ----
    pooled_t = pl.pallas_call(
        functools.partial(_pool_kernel, h=h, tph=tph),
        out_shape=jax.ShapeDtypeStruct((B, hf, C, wf), jnp.float32),
        grid=(B, R),
        in_specs=[
            pl.BlockSpec((W, wf), lambda b, r: (0, 0)),
            pl.BlockSpec((1, C, th, W), lambda b, r: (b, 0, r, 0)),
        ],
        out_specs=pl.BlockSpec((1, tph, C, wf), lambda b, r: (b, r, 0, 0)),
        compiler_params=pltpu.CompilerParams(
            dimension_semantics=("parallel", "parallel")),
    )(pw, x)

    # tiny (x/(h*w)-sized) layout glue in XLA
    pooled = pooled_t.transpose(0, 2, 1, 3).reshape(B, C, P)

    # ---- pass 2: Conv1d(C, C, k) over the patch axis + sigmoid (tiny) ----
    scale = pl.pallas_call(
        functools.partial(_scale_kernel, k=k, pad=pad, C=C, P=P),
        out_shape=jax.ShapeDtypeStruct((B, C, P), jnp.float32),
        grid=(B,),
        in_specs=[
            pl.BlockSpec((C, k * C), lambda b: (0, 0)),
            pl.BlockSpec((1, C, P), lambda b: (b, 0, 0)),
        ],
        out_specs=pl.BlockSpec((1, C, P), lambda b: (b, 0, 0)),
        scratch_shapes=[
            pltpu.VMEM((C, P + 2 * pad), jnp.float32),
            pltpu.VMEM((k * C, P), jnp.float32),
        ],
        compiler_params=pltpu.CompilerParams(dimension_semantics=("parallel",)),
    )(w2, pooled)

    scale_t = scale.reshape(B, C, hf, wf).transpose(0, 2, 1, 3)   # (B, hf, C, wf)

    # ---- pass 3: expand gates to pixels and rescale x (read x + write out) ----
    # TODO(synk): could alias the output onto x via input_output_aliases once
    # the caller donates x; without donation XLA would insert an extra copy.
    out = pl.pallas_call(
        functools.partial(_rescale_kernel, h=h, tph=tph),
        out_shape=jax.ShapeDtypeStruct((B, C, H, W), x.dtype),
        grid=(B, R),
        in_specs=[
            pl.BlockSpec((wf, W), lambda b, r: (0, 0)),
            pl.BlockSpec((1, tph, C, wf), lambda b, r: (b, r, 0, 0)),
            pl.BlockSpec((1, C, th, W), lambda b, r: (b, 0, r, 0)),
        ],
        out_specs=pl.BlockSpec((1, C, th, W), lambda b, r: (b, 0, r, 0)),
        compiler_params=pltpu.CompilerParams(
            dimension_semantics=("parallel", "parallel")),
    )(ew, scale_t, x)
    return out


def patch_spatial_attention_ref(x, conv_w, h, w):
    """Pure-JAX reference mirroring the PyTorch forward."""
    B, C, H, W = x.shape
    hf, wf = H // h, W // w
    P = hf * wf
    k = conv_w.shape[-1]
    pad = (k - 1) // 2
    y = (x.reshape(B, C, hf, h, wf, w)
          .transpose(0, 1, 2, 4, 3, 5)
          .reshape(B, C, P, h, w))
    pooled = y.mean(axis=(-2, -1))                              # (B, C, P)
    conv = jax.lax.conv_general_dilated(
        pooled, conv_w, window_strides=(1,), padding=[(pad, pad)],
        dimension_numbers=("NCH", "OIH", "NCH"))                # (B, C, P)
    scale = jax.nn.sigmoid(conv)
    yexp = jnp.broadcast_to(scale[:, :, :, None, None], (B, C, P, h, w))
    yexp = (yexp.reshape(B, C, hf, wf, h, w)
                .transpose(0, 1, 2, 4, 3, 5)
                .reshape(B, C, H, W))
    return x * yexp


if __name__ == "__main__":
    B, C, H, W = 2, 4, 16, 16
    h, w, k = 4, 4, 3

    key = jax.random.PRNGKey(0)
    kx, kw = jax.random.split(key)
    x = jax.random.normal(kx, (B, C, H, W), dtype=jnp.float32)
    # Deterministic synthetic Conv1d weight: (out_ch=C, in_ch=C, k), no bias.
    conv_w = 0.3 * jax.random.normal(kw, (C, C, k), dtype=jnp.float32)

    out = patch_spatial_attention(x, conv_w, h, w)
    out = jax.block_until_ready(out)

    ref = patch_spatial_attention_ref(x, conv_w, h, w)
    assert out.shape == (B, C, H, W)
    assert jnp.allclose(out, ref, atol=1e-4, rtol=1e-4), "mismatch vs reference"

    print("KERNEL_OK")
</pallas_src>

<mosaic_0001>
module attributes {stable_mosaic.version = 11 : i64} {
  func.func @_pool_kernel(%arg0: i32, %arg1: i32, %arg2: memref<16x4xf32, #tpu.memory_space<vmem>>, %arg3: memref<1x4x8x16xf32, #tpu.memory_space<vmem>>, %arg4: memref<1x2x4x4xf32, #tpu.memory_space<vmem>>) attributes {dimension_semantics = [#tpu.dimension_semantics<parallel>, #tpu.dimension_semantics<parallel>], iteration_bounds = array<i64: 2, 2>, scalar_prefetch = 0 : i64, scratch_operands = 0 : i64, tpu.core_type = #tpu.core_type<tc>, window_params = [{pipeline_mode = #tpu.pipeline_mode<synchronous>, transform_indices = @transform_0, window_bounds = array<i64: 16, 4>}, {transform_indices = @transform_1, window_bounds = array<i64: 1, 4, 8, 16>}, {transform_indices = @transform_2, window_bounds = array<i64: 1, 2, 4, 4>}]} {
    %c0 = arith.constant 0 : index
    %c0_0 = arith.constant 0 : index
    %0 = vector.load %arg2[%c0, %c0_0] : memref<16x4xf32, #tpu.memory_space<vmem>>, vector<16x4xf32>
    %c0_1 = arith.constant 0 : index
    %c0_2 = arith.constant 0 : index
    %c0_3 = arith.constant 0 : index
    %c0_4 = arith.constant 0 : index
    %1 = vector.load %arg3[%c0_1, %c0_2, %c0_3, %c0_4] : memref<1x4x8x16xf32, #tpu.memory_space<vmem>>, vector<1x4x4x16xf32>
    %2 = vector.shape_cast %1 : vector<1x4x4x16xf32> to vector<4x4x16xf32>
    %3 = vector.extract_strided_slice %2 {offsets = [0, 0, 0], sizes = [4, 1, 16], strides = [1, 1, 1]} : vector<4x4x16xf32> to vector<4x1x16xf32>
    %4 = vector.shape_cast %3 : vector<4x1x16xf32> to vector<4x16xf32>
    %5 = vector.extract_strided_slice %2 {offsets = [0, 1, 0], sizes = [4, 1, 16], strides = [1, 1, 1]} : vector<4x4x16xf32> to vector<4x1x16xf32>
    %6 = vector.shape_cast %5 : vector<4x1x16xf32> to vector<4x16xf32>
    %7 = arith.addf %4, %6 : vector<4x16xf32>
    %8 = vector.extract_strided_slice %2 {offsets = [0, 2, 0], sizes = [4, 1, 16], strides = [1, 1, 1]} : vector<4x4x16xf32> to vector<4x1x16xf32>
    %9 = vector.shape_cast %8 : vector<4x1x16xf32> to vector<4x16xf32>
    %10 = arith.addf %7, %9 : vector<4x16xf32>
    %11 = vector.extract_strided_slice %2 {offsets = [0, 3, 0], sizes = [4, 1, 16], strides = [1, 1, 1]} : vector<4x4x16xf32> to vector<4x1x16xf32>
    %12 = vector.shape_cast %11 : vector<4x1x16xf32> to vector<4x16xf32>
    %13 = arith.addf %10, %12 : vector<4x16xf32>
    %cst = arith.constant dense<0.000000e+00> : vector<4x4xf32>
    %14 = tpu.matmul %13, %0, %cst {dimension_numbers = #tpu.dot_dimension_numbers<[1], [0], [0], [1], [0, 0, 1, 1], [], []>} : vector<4x16xf32>, vector<16x4xf32>, vector<4x4xf32> -> vector<4x4xf32>
    %c0_5 = arith.constant 0 : index
    %c0_6 = arith.constant 0 : index
    %c0_7 = arith.constant 0 : index
    %c0_8 = arith.constant 0 : index
    %15 = vector.load %arg4[%c0_5, %c0_6, %c0_7, %c0_8] : memref<1x2x4x4xf32, #tpu.memory_space<vmem>>, vector<1x1x4x4xf32>
    %16 = vector.shape_cast %15 : vector<1x1x4x4xf32> to vector<4x4xf32>
    %17 = vector.shape_cast %14 : vector<4x4xf32> to vector<1x1x4x4xf32>
    tpu.vector_store %arg4[%c0_5, %c0_6, %c0_7, %c0_8], %17 {strides = array<i32>} : memref<1x2x4x4xf32, #tpu.memory_space<vmem>>, vector<1x1x4x4xf32>,
    %c0_9 = arith.constant 0 : index
    %c0_10 = arith.constant 0 : index
    %c4 = arith.constant 4 : index
    %c0_11 = arith.constant 0 : index
    %18 = vector.load %arg3[%c0_9, %c0_10, %c4, %c0_11] : memref<1x4x8x16xf32, #tpu.memory_space<vmem>>, vector<1x4x4x16xf32>
    %19 = vector.shape_cast %18 : vector<1x4x4x16xf32> to vector<4x4x16xf32>
    %20 = vector.extract_strided_slice %19 {offsets = [0, 0, 0], sizes = [4, 1, 16], strides = [1, 1, 1]} : vector<4x4x16xf32> to vector<4x1x16xf32>
    %21 = vector.shape_cast %20 : vector<4x1x16xf32> to vector<4x16xf32>
    %22 = vector.extract_strided_slice %19 {offsets = [0, 1, 0], sizes = [4, 1, 16], strides = [1, 1, 1]} : vector<4x4x16xf32> to vector<4x1x16xf32>
    %23 = vector.shape_cast %22 : vector<4x1x16xf32> to vector<4x16xf32>
    %24 = arith.addf %21, %23 : vector<4x16xf32>
    %25 = vector.extract_strided_slice %19 {offsets = [0, 2, 0], sizes = [4, 1, 16], strides = [1, 1, 1]} : vector<4x4x16xf32> to vector<4x1x16xf32>
    %26 = vector.shape_cast %25 : vector<4x1x16xf32> to vector<4x16xf32>
    %27 = arith.addf %24, %26 : vector<4x16xf32>
    %28 = vector.extract_strided_slice %19 {offsets = [0, 3, 0], sizes = [4, 1, 16], strides = [1, 1, 1]} : vector<4x4x16xf32> to vector<4x1x16xf32>
    %29 = vector.shape_cast %28 : vector<4x1x16xf32> to vector<4x16xf32>
    %30 = arith.addf %27, %29 : vector<4x16xf32>
    %cst_12 = arith.constant dense<0.000000e+00> : vector<4x4xf32>
    %31 = tpu.matmul %30, %0, %cst_12 {dimension_numbers = #tpu.dot_dimension_numbers<[1], [0], [0], [1], [0, 0, 1, 1], [], []>} : vector<4x16xf32>, vector<16x4xf32>, vector<4x4xf32> -> vector<4x4xf32>
    %c0_13 = arith.constant 0 : index
    %c1 = arith.constant 1 : index
    %c0_14 = arith.constant 0 : index
    %c0_15 = arith.constant 0 : index
    %32 = vector.load %arg4[%c0_13, %c1, %c0_14, %c0_15] : memref<1x2x4x4xf32, #tpu.memory_space<vmem>>, vector<1x1x4x4xf32>
    %33 = vector.shape_cast %32 : vector<1x1x4x4xf32> to vector<4x4xf32>
    %34 = vector.shape_cast %31 : vector<4x4xf32> to vector<1x1x4x4xf32>
    tpu.vector_store %arg4[%c0_13, %c1, %c0_14, %c0_15], %34 {strides = array<i32>} : memref<1x2x4x4xf32, #tpu.memory_space<vmem>>, vector<1x1x4x4xf32>,
    return
  }
  func.func @transform_0(%arg0: i32, %arg1: i32) -> (i32, i32) {
    %c0_i32 = arith.constant 0 : i32
    %c0_i32_0 = arith.constant 0 : i32
    %c0_i32_1 = arith.constant 0 : i32
    return %c0_i32, %c0_i32_0 : i32, i32
  }
  func.func @transform_1(%arg0: i32, %arg1: i32) -> (i32, i32, i32, i32) {
    %c0_i32 = arith.constant 0 : i32
    %c0_i32_0 = arith.constant 0 : i32
    %c0_i32_1 = arith.constant 0 : i32
    return %arg0, %c0_i32, %arg1, %c0_i32_0 : i32, i32, i32, i32
  }
  func.func @transform_2(%arg0: i32, %arg1: i32) -> (i32, i32, i32, i32) {
    %c0_i32 = arith.constant 0 : i32
    %c0_i32_0 = arith.constant 0 : i32
    %c0_i32_1 = arith.constant 0 : i32
    return %arg0, %arg1, %c0_i32, %c0_i32_0 : i32, i32, i32, i32
  }
}

module attributes {stable_mosaic.version = 11 : i64} {
  func.func @_scale_kernel(%arg0: i32, %arg1: memref<4x12xf32, #tpu.memory_space<vmem>>, %arg2: memref<1x4x16xf32, #tpu.memory_space<vmem>>, %arg3: memref<1x4x16xf32, #tpu.memory_space<vmem>>, %arg4: memref<4x18xf32, #tpu.memory_space<vmem>>, %arg5: memref<12x16xf32, #tpu.memory_space<vmem>>) attributes {dimension_semantics = [#tpu.dimension_semantics<parallel>], iteration_bounds = array<i64: 2>, scalar_prefetch = 0 : i64, scratch_operands = 2 : i64, tpu.core_type = #tpu.core_type<tc>, window_params = [{pipeline_mode = #tpu.pipeline_mode<synchronous>, transform_indices = @transform_0, window_bounds = array<i64: 4, 12>}, {transform_indices = @transform_1, window_bounds = array<i64: 1, 4, 16>}, {transform_indices = @transform_2, window_bounds = array<i64: 1, 4, 16>}]} {
    %cst = arith.constant 0.000000e+00 : f32
    %0 = vector.broadcast %cst : f32 to vector<4x18xf32>
    %c0 = arith.constant 0 : index
    %c0_0 = arith.constant 0 : index
    %1 = vector.load %arg4[%c0, %c0_0] : memref<4x18xf32, #tpu.memory_space<vmem>>, vector<4x18xf32>
    tpu.vector_store %arg4[%c0, %c0_0], %0 {strides = array<i32>} : memref<4x18xf32, #tpu.memory_space<vmem>>, vector<4x18xf32>,
    %c0_1 = arith.constant 0 : index
    %c0_2 = arith.constant 0 : index
    %c0_3 = arith.constant 0 : index
    %2 = vector.load %arg2[%c0_1, %c0_2, %c0_3] : memref<1x4x16xf32, #tpu.memory_space<vmem>>, vector<1x4x16xf32>
    %3 = vector.shape_cast %2 : vector<1x4x16xf32> to vector<4x16xf32>
    %c0_4 = arith.constant 0 : index
    %c1 = arith.constant 1 : index
    %4 = vector.load %arg4[%c0_4, %c1] : memref<4x18xf32, #tpu.memory_space<vmem>>, vector<4x16xf32>
    tpu.vector_store %arg4[%c0_4, %c1], %3 {strides = array<i32>} : memref<4x18xf32, #tpu.memory_space<vmem>>, vector<4x16xf32>,
    %c0_5 = arith.constant 0 : index
    %c0_6 = arith.constant 0 : index
    %5 = vector.load %arg4[%c0_5, %c0_6] : memref<4x18xf32, #tpu.memory_space<vmem>>, vector<4x18xf32>
    %6 = vector.extract_strided_slice %5 {offsets = [0, 0], sizes = [4, 16], strides = [1, 1]} : vector<4x18xf32> to vector<4x16xf32>
    %c0_7 = arith.constant 0 : index
    %c0_8 = arith.constant 0 : index
    %7 = vector.load %arg5[%c0_7, %c0_8] : memref<12x16xf32, #tpu.memory_space<vmem>>, vector<4x16xf32>
    tpu.vector_store %arg5[%c0_7, %c0_8], %6 {strides = array<i32>} : memref<12x16xf32, #tpu.memory_space<vmem>>, vector<4x16xf32>,
    %8 = vector.extract_strided_slice %5 {offsets = [0, 1], sizes = [4, 16], strides = [1, 1]} : vector<4x18xf32> to vector<4x16xf32>
    %c4 = arith.constant 4 : index
    %c0_9 = arith.constant 0 : index
    %9 = vector.load %arg5[%c4, %c0_9] : memref<12x16xf32, #tpu.memory_space<vmem>>, vector<4x16xf32>
    tpu.vector_store %arg5[%c4, %c0_9], %8 {strides = array<i32>} : memref<12x16xf32, #tpu.memory_space<vmem>>, vector<4x16xf32>,
    %10 = vector.extract_strided_slice %5 {offsets = [0, 2], sizes = [4, 16], strides = [1, 1]} : vector<4x18xf32> to vector<4x16xf32>
    %c8 = arith.constant 8 : index
    %c0_10 = arith.constant 0 : index
    %11 = vector.load %arg5[%c8, %c0_10] : memref<12x16xf32, #tpu.memory_space<vmem>>, vector<4x16xf32>
    tpu.vector_store %arg5[%c8, %c0_10], %10 {strides = array<i32>} : memref<12x16xf32, #tpu.memory_space<vmem>>, vector<4x16xf32>,
    %c0_11 = arith.constant 0 : index
    %c0_12 = arith.constant 0 : index
    %12 = vector.load %arg1[%c0_11, %c0_12] : memref<4x12xf32, #tpu.memory_space<vmem>>, vector<4x12xf32>
    %c0_13 = arith.constant 0 : index
    %c0_14 = arith.constant 0 : index
    %13 = vector.load %arg5[%c0_13, %c0_14] : memref<12x16xf32, #tpu.memory_space<vmem>>, vector<12x16xf32>
    %cst_15 = arith.constant dense<0.000000e+00> : vector<4x16xf32>
    %14 = tpu.matmul %12, %13, %cst_15 {dimension_numbers = #tpu.dot_dimension_numbers<[1], [0], [0], [1], [0, 0, 1, 1], [], []>} : vector<4x12xf32>, vector<12x16xf32>, vector<4x16xf32> -> vector<4x16xf32>
    %15 = arith.negf %14 : vector<4x16xf32>
    %16 = math.exp %15 : vector<4x16xf32>
    %cst_16 = arith.constant 1.000000e+00 : f32
    %17 = vector.broadcast %cst_16 : f32 to vector<4x16xf32>
    %18 = arith.addf %17, %16 : vector<4x16xf32>
    %19 = arith.divf %17, %18 : vector<4x16xf32>
    %c0_17 = arith.constant 0 : index
    %c0_18 = arith.constant 0 : index
    %c0_19 = arith.constant 0 : index
    %20 = vector.load %arg3[%c0_17, %c0_18, %c0_19] : memref<1x4x16xf32, #tpu.memory_space<vmem>>, vector<1x4x16xf32>
    %21 = vector.shape_cast %20 : vector<1x4x16xf32> to vector<4x16xf32>
    %22 = vector.shape_cast %19 : vector<4x16xf32> to vector<1x4x16xf32>
    tpu.vector_store %arg3[%c0_17, %c0_18, %c0_19], %22 {strides = array<i32>} : memref<1x4x16xf32, #tpu.memory_space<vmem>>, vector<1x4x16xf32>,
    return
  }
  func.func @transform_0(%arg0: i32) -> (i32, i32) {
    %c0_i32 = arith.constant 0 : i32
    %c0_i32_0 = arith.constant 0 : i32
    %c0_i32_1 = arith.constant 0 : i32
    return %c0_i32, %c0_i32_0 : i32, i32
  }
  func.func @transform_1(%arg0: i32) -> (i32, i32, i32) {
    %c0_i32 = arith.constant 0 : i32
    %c0_i32_0 = arith.constant 0 : i32
    %c0_i32_1 = arith.constant 0 : i32
    return %arg0, %c0_i32, %c0_i32_0 : i32, i32, i32
  }
  func.func @transform_2(%arg0: i32) -> (i32, i32, i32) {
    %c0_i32 = arith.constant 0 : i32
    %c0_i32_0 = arith.constant 0 : i32
    %c0_i32_1 = arith.constant 0 : i32
    return %arg0, %c0_i32, %c0_i32_0 : i32, i32, i32
  }
}

module attributes {stable_mosaic.version = 11 : i64} {
  func.func @_rescale_kernel(%arg0: i32, %arg1: i32, %arg2: memref<4x16xf32, #tpu.memory_space<vmem>>, %arg3: memref<1x2x4x4xf32, #tpu.memory_space<vmem>>, %arg4: memref<1x4x8x16xf32, #tpu.memory_space<vmem>>, %arg5: memref<1x4x8x16xf32, #tpu.memory_space<vmem>>) attributes {dimension_semantics = [#tpu.dimension_semantics<parallel>, #tpu.dimension_semantics<parallel>], iteration_bounds = array<i64: 2, 2>, scalar_prefetch = 0 : i64, scratch_operands = 0 : i64, tpu.core_type = #tpu.core_type<tc>, window_params = [{pipeline_mode = #tpu.pipeline_mode<synchronous>, transform_indices = @transform_0, window_bounds = array<i64: 4, 16>}, {transform_indices = @transform_1, window_bounds = array<i64: 1, 2, 4, 4>}, {transform_indices = @transform_2, window_bounds = array<i64: 1, 4, 8, 16>}, {transform_indices = @transform_3, window_bounds = array<i64: 1, 4, 8, 16>}]} {
    %c0 = arith.constant 0 : index
    %c0_0 = arith.constant 0 : index
    %0 = vector.load %arg2[%c0, %c0_0] : memref<4x16xf32, #tpu.memory_space<vmem>>, vector<4x16xf32>
    %c0_1 = arith.constant 0 : index
    %c0_2 = arith.constant 0 : index
    %c0_3 = arith.constant 0 : index
    %c0_4 = arith.constant 0 : index
    %1 = vector.load %arg3[%c0_1, %c0_2, %c0_3, %c0_4] : memref<1x2x4x4xf32, #tpu.memory_space<vmem>>, vector<1x1x4x4xf32>
    %2 = vector.shape_cast %1 : vector<1x1x4x4xf32> to vector<4x4xf32>
    %cst = arith.constant dense<0.000000e+00> : vector<4x16xf32>
    %3 = tpu.matmul %2, %0, %cst {dimension_numbers = #tpu.dot_dimension_numbers<[1], [0], [0], [1], [0, 0, 1, 1], [], []>} : vector<4x4xf32>, vector<4x16xf32>, vector<4x16xf32> -> vector<4x16xf32>
    %c0_5 = arith.constant 0 : index
    %c0_6 = arith.constant 0 : index
    %c0_7 = arith.constant 0 : index
    %c0_8 = arith.constant 0 : index
    %4 = vector.load %arg4[%c0_5, %c0_6, %c0_7, %c0_8] : memref<1x4x8x16xf32, #tpu.memory_space<vmem>>, vector<1x4x4x16xf32>
    %5 = vector.shape_cast %4 : vector<1x4x4x16xf32> to vector<4x4x16xf32>
    %6 = vector.shape_cast %3 : vector<4x16xf32> to vector<4x1x16xf32>
    %7 = vector.broadcast %6 : vector<4x1x16xf32> to vector<4x4x16xf32>
    %8 = arith.mulf %5, %7 : vector<4x4x16xf32>
    %c0_9 = arith.constant 0 : index
    %c0_10 = arith.constant 0 : index
    %c0_11 = arith.constant 0 : index
    %c0_12 = arith.constant 0 : index
    %9 = vector.load %arg5[%c0_9, %c0_10, %c0_11, %c0_12] : memref<1x4x8x16xf32, #tpu.memory_space<vmem>>, vector<1x4x4x16xf32>
    %10 = vector.shape_cast %9 : vector<1x4x4x16xf32> to vector<4x4x16xf32>
    %11 = vector.shape_cast %8 : vector<4x4x16xf32> to vector<1x4x4x16xf32>
    tpu.vector_store %arg5[%c0_9, %c0_10, %c0_11, %c0_12], %11 {strides = array<i32>} : memref<1x4x8x16xf32, #tpu.memory_space<vmem>>, vector<1x4x4x16xf32>,
    %c0_13 = arith.constant 0 : index
    %c1 = arith.constant 1 : index
    %c0_14 = arith.constant 0 : index
    %c0_15 = arith.constant 0 : index
    %12 = vector.load %arg3[%c0_13, %c1, %c0_14, %c0_15] : memref<1x2x4x4xf32, #tpu.memory_space<vmem>>, vector<1x1x4x4xf32>
    %13 = vector.shape_cast %12 : vector<1x1x4x4xf32> to vector<4x4xf32>
    %cst_16 = arith.constant dense<0.000000e+00> : vector<4x16xf32>
    %14 = tpu.matmul %13, %0, %cst_16 {dimension_numbers = #tpu.dot_dimension_numbers<[1], [0], [0], [1], [0, 0, 1, 1], [], []>} : vector<4x4xf32>, vector<4x16xf32>, vector<4x16xf32> -> vector<4x16xf32>
    %c0_17 = arith.constant 0 : index
    %c0_18 = arith.constant 0 : index
    %c4 = arith.constant 4 : index
    %c0_19 = arith.constant 0 : index
    %15 = vector.load %arg4[%c0_17, %c0_18, %c4, %c0_19] : memref<1x4x8x16xf32, #tpu.memory_space<vmem>>, vector<1x4x4x16xf32>
    %16 = vector.shape_cast %15 : vector<1x4x4x16xf32> to vector<4x4x16xf32>
    %17 = vector.shape_cast %14 : vector<4x16xf32> to vector<4x1x16xf32>
    %18 = vector.broadcast %17 : vector<4x1x16xf32> to vector<4x4x16xf32>
    %19 = arith.mulf %16, %18 : vector<4x4x16xf32>
    %c0_20 = arith.constant 0 : index
    %c0_21 = arith.constant 0 : index
    %c4_22 = arith.constant 4 : index
    %c0_23 = arith.constant 0 : index
    %20 = vector.load %arg5[%c0_20, %c0_21, %c4_22, %c0_23] : memref<1x4x8x16xf32, #tpu.memory_space<vmem>>, vector<1x4x4x16xf32>
    %21 = vector.shape_cast %20 : vector<1x4x4x16xf32> to vector<4x4x16xf32>
    %22 = vector.shape_cast %19 : vector<4x4x16xf32> to vector<1x4x4x16xf32>
    tpu.vector_store %arg5[%c0_20, %c0_21, %c4_22, %c0_23], %22 {strides = array<i32>} : memref<1x4x8x16xf32, #tpu.memory_space<vmem>>, vector<1x4x4x16xf32>,
    return
  }
  func.func @transform_0(%arg0: i32, %arg1: i32) -> (i32, i32) {
    %c0_i32 = arith.constant 0 : i32
    %c0_i32_0 = arith.constant 0 : i32
    %c0_i32_1 = arith.constant 0 : i32
    return %c0_i32, %c0_i32_0 : i32, i32
  }
  func.func @transform_1(%arg0: i32, %arg1: i32) -> (i32, i32, i32, i32) {
    %c0_i32 = arith.constant 0 : i32
    %c0_i32_0 = arith.constant 0 : i32
    %c0_i32_1 = arith.constant 0 : i32
    return %arg0, %arg1, %c0_i32, %c0_i32_0 : i32, i32, i32, i32
  }
  func.func @transform_2(%arg0: i32, %arg1: i32) -> (i32, i32, i32, i32) {
    %c0_i32 = arith.constant 0 : i32
    %c0_i32_0 = arith.constant 0 : i32
    %c0_i32_1 = arith.constant 0 : i32
    return %arg0, %c0_i32, %arg1, %c0_i32_0 : i32, i32, i32, i32
  }
  func.func @transform_3(%arg0: i32, %arg1: i32) -> (i32, i32, i32, i32) {
    %c0_i32 = arith.constant 0 : i32
    %c0_i32_0 = arith.constant 0 : i32
    %c0_i32_1 = arith.constant 0 : i32
    return %arg0, %c0_i32, %arg1, %c0_i32_0 : i32, i32, i32, i32
  }
}

</mosaic_0001>

<llo_original>
// kernel: patch_spatial_attention.4
$region0: #{patch_spatial_attention.4}
  #allocation0 [shape = 'u32[]', space=smem, size = 0x4, offset = 0x4, fixed_abs, tag = 'smem constant byte address 0x4 - core index']
  #allocation1 [shape = 'u32[144,128]{1,0:T(1,128)}', space=vmem, size = 0x12000, scoped, tag = 'internal scratch']
  #allocation2 [shape = 'f32[4,18]{1,0:T(4,128)}', space=vmem, size = 0x800, scoped, tag = 'scratch operand']
  #allocation3 [shape = 'f32[12,16]{1,0:T(8,128)}', space=vmem, size = 0x2000, scoped, tag = 'scratch operand']
  %s0 = inlined_call_operand.vmem [shape: f32[4,12], index: 0, kind: input, shape index: {}]
  %s1 = inlined_call_operand.vmem [shape: f32[2,4,16], index: 1, kind: input, shape index: {}]
  %s2 = inlined_call_operand.vmem [shape: f32[2,4,16], index: 2, kind: output, shape index: {}]
  %s3 = sld [smem:[#allocation0]]
  $region41: #{patch_spatial_attention.4} parent=0
    _
  %s5 = ssub.s32 1, %s3
  %s6 = scalar_select 0, %s5, %s3
  loop: start=0, step=1, limit=4
  $region2: #{patch_spatial_attention.4} parent=0 // loop_pre_header
    _
  $region3: #{patch_spatial_attention.4} parent=0 // loop_header
    %s8 = sphi 0, %s12
    %p9 = scmp.ge.s32.totalorder %s8, 4
    %s16 = sphi 0, %s16
    %s18 = sphi 0, %s16
    %s19 = sphi 0, %s18
    %s33 = sphi 0, %s19
    %s39 = sphi 0, %s41
    %s42 = sphi 0, %s39
    %s43 = sphi 0, %s42
    %s59 = sphi 0, %s43
    %s65 = sphi 0, %s67
    %s68 = sphi 0, %s65
    %s69 = sphi 0, %s68
    %s85 = sphi 0, %s69
  $region4: #{patch_spatial_attention.4} parent=0 // loop_header_branch
    %11 = sbr.rel (%p9) target = $region8
  $region5: #{patch_spatial_attention.4} parent=0 // loop_body
    %s13 = ssub.s32 %s8, 1
    %s14 = ssub.s32 %s8, 2
    %s15 = sadd.s32 %s8, 1
    %s17 = sadd.s32 %s16, 1
    %p20 = scmp.eq.s32.totalorder %s8, 1
    %p21 = scmp.ne.s32.totalorder %s16, %s18
    %p22 = scmp.eq.s32.totalorder %s8, 0
    %p23 = por %p21, %p22
    %p24 = scmp.ne.s32.totalorder %s16, %s18
    %p25 = scmp.eq.s32.totalorder %s13, 1
    %p26 = por %p24, %p25
    %p27 = scmp.ne.s32.totalorder %s18, %s19
    %p28 = scmp.eq.s32.totalorder %s13, 0
    %p29 = por %p27, %p28
    %p30 = scmp.ne.s32.totalorder %s18, %s19
    %p31 = scmp.eq.s32.totalorder %s14, 1
    %p32 = por %p30, %p31
    %p34 = scmp.ne.s32.totalorder %s19, %s33
    %p35 = scmp.eq.s32.totalorder %s14, 0
    %p36 = por %p34, %p35
    %s37 = ssub.s32 %s8, %s15
    %p38 = scmp.eq.s32.totalorder %s37, 0
    %s40 = sadd.s32 %s39, 1
    %s41 = scalar_select %p38, %s39, %s40
    %p44 = pneg %p38
    %p45 = scmp.eq.s32.totalorder %s8, 1
    %p46 = por %p44, %p45
    %p47 = scmp.ne.s32.totalorder %s39, %s42
    %p48 = scmp.eq.s32.totalorder %s8, 0
    %p49 = por %p47, %p48
    %p50 = scmp.ne.s32.totalorder %s39, %s42
    %p51 = scmp.eq.s32.totalorder %s13, 1
    %p52 = por %p50, %p51
    %p53 = scmp.ne.s32.totalorder %s42, %s43
    %p54 = scmp.eq.s32.totalorder %s13, 0
    %p55 = por %p53, %p54
    %p56 = scmp.ne.s32.totalorder %s42, %s43
    %p57 = scmp.eq.s32.totalorder %s14, 1
    %p58 = por %p56, %p57
    %p60 = scmp.ne.s32.totalorder %s43, %s59
    %p61 = scmp.eq.s32.totalorder %s14, 0
    %p62 = por %p60, %p61
    %s63 = ssub.s32 %s8, %s15
    %p64 = scmp.eq.s32.totalorder %s63, 0
    %s66 = sadd.s32 %s65, 1
    %s67 = scalar_select %p64, %s65, %s66
    %p70 = pneg %p64
    %p71 = scmp.eq.s32.totalorder %s8, 1
    %p72 = por %p70, %p71
    %p73 = scmp.ne.s32.totalorder %s65, %s68
    %p74 = scmp.eq.s32.totalorder %s8, 0
    %p75 = por %p73, %p74
    %p76 = scmp.ne.s32.totalorder %s65, %s68
    %p77 = scmp.eq.s32.totalorder %s13, 1
    %p78 = por %p76, %p77
    %p79 = scmp.ne.s32.totalorder %s68, %s69
    %p80 = scmp.eq.s32.totalorder %s13, 0
    %p81 = por %p79, %p80
    %p82 = scmp.ne.s32.totalorder %s68, %s69
    %p83 = scmp.eq.s32.totalorder %s14, 1
    %p84 = por %p82, %p83
    %p86 = scmp.ne.s32.totalorder %s69, %s85
    %p87 = scmp.eq.s32.totalorder %s14, 0
    %p88 = por %p86, %p87
    %p89 = scmp.le.s32.totalorder 1, %s8
    %p90 = scmp.lt.s32.totalorder %s8, 3
    %p91 = pnand %p89, %p90
    %p92 = pneg %p91
    // Predicated region
    $region9: #{patch_spatial_attention.4} parent=5 // pred_check
      _
    $region10: #{patch_spatial_attention.4} parent=5 // pred_check_branch
      %94 = sbr.rel (%p91) target = $region12
    $region11: #{patch_spatial_attention.4} parent=5 // pred_region
      %s95 = ssub.s32 %s8, 1
      // Predicated region
      $region13: #{patch_spatial_attention.4} parent=11 // pred_check
        %p96 = pneg %p29
      $region14: #{patch_spatial_attention.4} parent=11 // pred_check_branch
        %98 = sbr.rel (%p96) target = $region16
      $region15: #{patch_spatial_attention.4} parent=11 // pred_region
        _
      $region16: #{patch_spatial_attention.4} parent=11 // pred_fallthru
        _
    $region12: #{patch_spatial_attention.4} parent=5 // pred_fallthru
      _
    %p99 = scmp.lt.s32.totalorder %s8, 2
    // Predicated region
    $region17: #{patch_spatial_attention.4} parent=5 // pred_check
      %p100 = pneg %p99
    $region18: #{patch_spatial_attention.4} parent=5 // pred_check_branch
      %102 = sbr.rel (%p100) target = $region20
    $region19: #{patch_spatial_attention.4} parent=5 // pred_region
      // Predicated region
      $region21: #{patch_spatial_attention.4} parent=19 // pred_check
        %p103 = pneg %p49
      $region22: #{patch_spatial_attention.4} parent=19 // pred_check_branch
        %105 = sbr.rel (%p103) target = $region24
      $region23: #{patch_spatial_attention.4} parent=19 // pred_region
        %p106 = scmp.lt.s32.totalorder %s8, 1
        %s107 = scalar_select %p106, %s8, 1
        %s108 = smul.addr %s107, 4
        %s109 = scalar_lea.vmem %s1, %s108
      $region24: #{patch_spatial_attention.4} parent=19 // pred_fallthru
        _
    $region20: #{patch_spatial_attention.4} parent=5 // pred_fallthru
      _
    %p110 = scmp.le.s32.totalorder 1, %s8
    %p111 = scmp.lt.s32.totalorder %s8, 3
    %p112 = pnand %p110, %p111
    %p113 = pneg %p112
    // Predicated region
    $region25: #{patch_spatial_attention.4} parent=5 // pred_check
      _
    $region26: #{patch_spatial_attention.4} parent=5 // pred_check_branch
      %115 = sbr.rel (%p112) target = $region28
    $region27: #{patch_spatial_attention.4} parent=5 // pred_region
      %s116 = ssub.s32 %s8, 1
      %p117 = pneg %p29
      %p118 = pneg %p26
      %p119 = scmp.lt.s32.totalorder %s13, 1
      %s120 = scalar_select %p119, %s13, 1
      %s121 = smul.addr %s120, 4
      %s122 = scalar_lea.vmem %s1, %s121
      %p123 = pneg %p55
      %p124 = pneg %p52
      %p125 = pneg %p81
      %p126 = pneg %p78
      %p127 = scmp.lt.s32.totalorder %s13, 1
      %s128 = scalar_select %p127, %s13, 1
      %s129 = smul.addr %s128, 4
      %s130 = scalar_lea.vmem %s2, %s129
      %p131 = scmp.lt.s32.totalorder %s13, 1
      %s132 = scalar_select %p131, %s13, 1
      %s133 = smul.addr %s132, 4
      %s134 = scalar_lea.vmem %s1, %s133
      %p135 = scmp.lt.s32.totalorder %s13, 1
      %s136 = scalar_select %p135, %s13, 1
      %s137 = smul.addr %s136, 4
      %s138 = scalar_lea.vmem %s2, %s137
      %vm139 = vcmask 142336
      %140 = vst.msk [vmem:[#allocation2] sm:$0xf] %vm139, 0.0
      %v141 = vld [vmem:[%s134] sm:$0xf]
      %143 = vrot.lane.b32.xlu0 %v141, 1
      %v144 = vpop.permute.xlu0 %143
      %vm146 = vcmask 134152
      %147 = vst.msk [vmem:[#allocation2] sm:$0xf] %vm146, %v144
      %v148 = vld [vmem:[#allocation2] sm:$0xf]
      %vm149 = vcmask 125952
      %150 = vst.msk [vmem:[#allocation3] sm:$0xf] %vm149, %v148
      %152 = vrot.lane.b32.xlu0 %v148, 127
      %v153 = vpop.permute.xlu0 %152
      %155 = vst.msk [vmem:[#allocation3 + $0x4] sm:$0xf] %vm149, %v153
      %156 = vrot.lane.b32.xlu0 %v148, 126
      %v157 = vpop.permute.xlu0 %156
      %159 = vst.msk [vmem:[#allocation3 + $0x8] sm:$0xf] %vm149, %v157
      %v160 = vld [vmem:[%s0] sm:$0xf]
      %v161 = vld [vmem:[#allocation3] sm:$0xff]
      %v162 = vld [vmem:[#allocation3 + $0x8] sm:$0xf]
      %vm163 = vcmask 97280
      %v165 = vsel %vm163, %v160, 0
      %vm167 = vcmask 1043456
      %v169 = vsel %vm167, %v162, 0
      %171 = vmatprep.subr.mxu0 0.0
      %172 = vmatpush1.msra.mxu0 %v161
      %173 = vmatprep.subr.mxu0 0.0
      %174 = vmatpush1.msra.mxu0 %v169
      %175 = vmatprep.subr.mxu0 0.0
      %176 = vmatpush1.msra.mxu0 0.0
      %177 = vmatprep.subr.mxu0 0.0
      %178 = vmatpush1.msra.mxu0 0.0
      %179 = vmatprep.subr.mxu0 0.0
      %180 = vmatpush1.msra.mxu0 0.0
      %181 = vmatprep.subr.mxu0 0.0
      %182 = vmatpush1.msra.mxu0 0.0
      %183 = vmatprep.subr.mxu0 0.0
      %184 = vmatpush1.msra.mxu0 0.0
      %185 = vmatprep.subr.mxu0 0.0
      %186 = vmatpush1.msra.mxu0 0.0
      %187 = vmatprep.subr.mxu0 0.0
      %188 = vmatpush1.msra.mxu0 0.0
      %189 = vmatprep.subr.mxu0 0.0
      %190 = vmatpush1.msra.mxu0 0.0
      %191 = vmatprep.subr.mxu0 0.0
      %192 = vmatpush1.msra.mxu0 0.0
      %193 = vmatprep.subr.mxu0 0.0
      %194 = vmatpush1.msra.mxu0 0.0
      %195 = vmatprep.subr.mxu0 0.0
      %196 = vmatpush1.msra.mxu0 0.0
      %197 = vmatprep.subr.mxu0 0.0
      %198 = vmatpush1.msra.mxu0 0.0
      %199 = vmatprep.subr.mxu0 0.0
      %200 = vmatpush1.msra.mxu0 0.0
      %201 = vmatprep.subr.mxu0 0.0
      %202 = vmatpush1.msra.mxu0 0.0
      %203 = vmatprep.subr.mxu0 0.0
      %204 = vmatpush1.msra.mxu0 0.0
      %205 = vmatprep.subr.mxu0 0.0
      %206 = vmatpush1.msra.mxu0 0.0
      %207 = vmatprep.subr.mxu0 0.0
      %208 = vmatpush1.msra.mxu0 0.0
      %209 = vmatprep.subr.mxu0 0.0
      %210 = vmatpush1.msra.mxu0 0.0
      %211 = vmatprep.subr.mxu0 0.0
      %212 = vmatpush1.msra.mxu0 0.0
      %213 = vmatprep.subr.mxu0 0.0
      %214 = vmatpush1.msra.mxu0 0.0
      %215 = vmatprep.subr.mxu0 0.0
      %216 = vmatpush1.msra.mxu0 0.0
      %217 = vmatprep.subr.mxu0 0.0
      %218 = vmatpush1.msra.mxu0 0.0
      %219 = vmatprep.subr.mxu0 0.0
      %220 = vmatpush1.msra.mxu0 0.0
      %221 = vmatprep.subr.mxu0 0.0
      %222 = vmatpush1.msra.mxu0 0.0
      %223 = vmatprep.subr.mxu0 0.0
      %224 = vmatpush1.msra.mxu0 0.0
      %225 = vmatprep.subr.mxu0 0.0
      %226 = vmatpush1.msra.mxu0 0.0
      %227 = vmatprep.subr.mxu0 0.0
      %228 = vmatpush1.msra.mxu0 0.0
      %229 = vmatprep.subr.mxu0 0.0
      %230 = vmatpush1.msra.mxu0 0.0
      %231 = vmatprep.subr.mxu0 0.0
      %232 = vmatpush1.msra.mxu0 0.0
      %233 = vmatprep.subr.mxu0 0.0
      %234 = vmatpush1.msra.mxu0 0.0
      %235 = vmatprep.mubr.f32.mxu0 0.0
      %236 = vmatmul.mubr.f32.gmra.mrb[0].mxu0 %v165
      %v237 = vpop.f32.mrb[0].mxu0
      %v238 = vadd.f32 0.0, %v237
      %v239 = vpop.f32.mrb[0].mxu0
      %240 = vdwg.mxu0
      %v241 = vxor.u32 %v238, 2147483648
      %v242 = vmul.f32 %v241, 1.442695
      %v243 = vpow.pop %v242
      %v244 = vadd.f32 %v243, 1.0
      %v245 = vrcp.pop %v244
      %v246 = vmul.f32 1.0, %v245
      %247 = vst.msk [vmem:[%s138] sm:$0xf] %vm149, %v246
      %p248 = scmp.lt.s32.totalorder %s13, 1
      %s249 = scalar_select %p248, %s13, 1
      %s250 = smul.addr %s249, 4
      %s251 = scalar_lea.vmem %s2, %s250
      // Predicated region
      $region29: #{patch_spatial_attention.4} parent=27 // pred_check
        %p252 = pneg %p78
      $region30: #{patch_spatial_attention.4} parent=27 // pred_check_branch
        %254 = sbr.rel (%p252) target = $region32
      $region31: #{patch_spatial_attention.4} parent=27 // pred_region
        _
      $region32: #{patch_spatial_attention.4} parent=27 // pred_fallthru
        _
    $region28: #{patch_spatial_attention.4} parent=5 // pred_fallthru
      _
    %p255 = scmp.le.s32.totalorder 2, %s8
    // Predicated region
    $region33: #{patch_spatial_attention.4} parent=5 // pred_check
      %p256 = pneg %p255
    $region34: #{patch_spatial_attention.4} parent=5 // pred_check_branch
      %258 = sbr.rel (%p256) target = $region36
    $region35: #{patch_spatial_attention.4} parent=5 // pred_region
      %s259 = ssub.s32 %s8, 2
      // Predicated region
      $region37: #{patch_spatial_attention.4} parent=35 // pred_check
        %p260 = pneg %p84
      $region38: #{patch_spatial_attention.4} parent=35 // pred_check_branch
        %262 = sbr.rel (%p260) target = $region40
      $region39: #{patch_spatial_attention.4} parent=35 // pred_region
        %p263 = scmp.lt.s32.totalorder %s14, 1
        %s264 = scalar_select %p263, %s14, 1
        %s265 = smul.addr %s264, 4
        %s266 = scalar_lea.vmem %s2, %s265
      $region40: #{patch_spatial_attention.4} parent=35 // pred_fallthru
        _
    $region36: #{patch_spatial_attention.4} parent=5 // pred_fallthru
      _
  $region6: #{patch_spatial_attention.4} parent=0 // loop_footer
    %s12 = sadd.s32 1, %s8
  $region7: #{patch_spatial_attention.4} parent=0 // loop_footer_branch
    %7 = sbr.rel target = $region3
  $region8: #{patch_spatial_attention.4} parent=0 // loop_exit
    _

// kernel: patch_spatial_attention.3
$region0: #{patch_spatial_attention.3}
  #allocation0 [shape = 'u32[]', space=smem, size = 0x4, offset = 0x4, fixed_abs, tag = 'smem constant byte address 0x4 - core index']
  #allocation1 [shape = 'u32[144,128]{1,0:T(1,128)}', space=vmem, size = 0x12000, scoped, tag = 'internal scratch']
  %s0 = inlined_call_operand.vmem [shape: f32[16,4], index: 0, kind: input, shape index: {}]
  %s1 = inlined_call_operand.hbm [shape: f32[2,4,16,16], index: 1, kind: input, shape index: {}]
  %s2 = inlined_call_operand.vmem [shape: f32[2,4,4,4], index: 2, kind: output, shape index: {}]
  %s3 = sld [smem:[#allocation0]]
  $region45: #{patch_spatial_attention.3} parent=0
    _
  %s5 = ssub.s32 1, %s3
  %s6 = scalar_select 0, %s5, %s3
  $region1: #{patch_spatial_attention.3} parent=0
    #allocation2 [shape = 'u8[32768]{0}', space=vmem, size = 0x8000, scoped, tag = 'input window, operand 1']
    #allocation3 [shape = 's32[2]{0}', space=sflag, size = 0x8, scoped, tag = 'scoped memory for patch_spatial_attention.3']
    %7 = vsyncpa [#allocation3], 0
    %s8 = scalar_lea.sflag [#allocation3], 1
    %9 = vsyncpa %s8, 0
    loop: start=0, step=1, limit=6
    $region2: #{patch_spatial_attention.3} parent=1 // loop_pre_header
      _
    $region3: #{patch_spatial_attention.3} parent=1 // loop_header
      %s11 = sphi 0, %s15
      %p12 = scmp.ge.s32.totalorder %s11, 6
      %s18 = sphi 0, %s30
      %s19 = sphi 0, %s26
      %s20 = sphi 0, %s18
      %s21 = sphi 0, %s19
      %s22 = sphi 0, %s20
      %s23 = sphi 0, %s21
      %s31 = sphi 0, %s31
      %s33 = sphi 0, %s31
      %s34 = sphi 0, %s33
      %s48 = sphi 0, %s34
      %s56 = sphi 0, %s58
      %s59 = sphi 0, %s56
      %s60 = sphi 0, %s59
      %s76 = sphi 0, %s60
      %s84 = sphi 0, %s86
      %s87 = sphi 0, %s84
      %s88 = sphi 0, %s87
      %s104 = sphi 0, %s88
    $region4: #{patch_spatial_attention.3} parent=1 // loop_header_branch
      %14 = sbr.rel (%p12) target = $region8
    $region5: #{patch_spatial_attention.3} parent=1 // loop_body
      %s16 = ssub.s32 %s11, 1
      %s17 = ssub.s32 %s11, 2
      %s24 = sadd.s32 1, %s19
      %p25 = scmp.ge.s32.totalorder %s24, 2
      %s26 = scalar_select %p25, 0, %s24
      %s27 = sadd.s32 1, %s18
      %s28 = scalar_select %p25, %s27, %s18
      %p29 = scmp.ge.s32.totalorder %s28, 2
      %s30 = scalar_select %p29, 0, %s28
      %s32 = sadd.s32 %s31, 1
      %p35 = scmp.eq.s32.totalorder %s11, 3
      %p36 = scmp.ne.s32.totalorder %s31, %s33
      %p37 = scmp.eq.s32.totalorder %s11, 0
      %p38 = por %p36, %p37
      %p39 = scmp.ne.s32.totalorder %s31, %s33
      %p40 = scmp.eq.s32.totalorder %s16, 3
      %p41 = por %p39, %p40
      %p42 = scmp.ne.s32.totalorder %s33, %s34
      %p43 = scmp.eq.s32.totalorder %s16, 0
      %p44 = por %p42, %p43
      %p45 = scmp.ne.s32.totalorder %s33, %s34
      %p46 = scmp.eq.s32.totalorder %s17, 3
      %p47 = por %p45, %p46
      %p49 = scmp.ne.s32.totalorder %s34, %s48
      %p50 = scmp.eq.s32.totalorder %s17, 0
      %p51 = por %p49, %p50
      %s52 = ssub.s32 %s18, %s30
      %s53 = ssub.s32 %s19, %s26
      %s54 = sor.u32 %s52, %s53
      %p55 = scmp.eq.s32.totalorder %s54, 0
      %s57 = sadd.s32 %s56, 1
      %s58 = scalar_select %p55, %s56, %s57
      %p61 = pneg %p55
      %p62 = scmp.eq.s32.totalorder %s11, 3
      %p63 = por %p61, %p62
      %p64 = scmp.ne.s32.totalorder %s56, %s59
      %p65 = scmp.eq.s32.totalorder %s11, 0
      %p66 = por %p64, %p65
      %p67 = scmp.ne.s32.totalorder %s56, %s59
      %p68 = scmp.eq.s32.totalorder %s16, 3
      %p69 = por %p67, %p68
      %p70 = scmp.ne.s32.totalorder %s59, %s60
      %p71 = scmp.eq.s32.totalorder %s16, 0
      %p72 = por %p70, %p71
      %p73 = scmp.ne.s32.totalorder %s59, %s60
      %p74 = scmp.eq.s32.totalorder %s17, 3
      %p75 = por %p73, %p74
      %p77 = scmp.ne.s32.totalorder %s60, %s76
      %p78 = scmp.eq.s32.totalorder %s17, 0
      %p79 = por %p77, %p78
      %s80 = ssub.s32 %s18, %s30
      %s81 = ssub.s32 %s19, %s26
      %s82 = sor.u32 %s80, %s81
      %p83 = scmp.eq.s32.totalorder %s82, 0
      %s85 = sadd.s32 %s84, 1
      %s86 = scalar_select %p83, %s84, %s85
      %p89 = pneg %p83
      %p90 = scmp.eq.s32.totalorder %s11, 3
      %p91 = por %p89, %p90
      %p92 = scmp.ne.s32.totalorder %s84, %s87
      %p93 = scmp.eq.s32.totalorder %s11, 0
      %p94 = por %p92, %p93
      %p95 = scmp.ne.s32.totalorder %s84, %s87
      %p96 = scmp.eq.s32.totalorder %s16, 3
      %p97 = por %p95, %p96
      %p98 = scmp.ne.s32.totalorder %s87, %s88
      %p99 = scmp.eq.s32.totalorder %s16, 0
      %p100 = por %p98, %p99
      %p101 = scmp.ne.s32.totalorder %s87, %s88
      %p102 = scmp.eq.s32.totalorder %s17, 3
      %p103 = por %p101, %p102
      %p105 = scmp.ne.s32.totalorder %s88, %s104
      %p106 = scmp.eq.s32.totalorder %s17, 0
      %p107 = por %p105, %p106
      %p108 = scmp.le.s32.totalorder 1, %s11
      %p109 = scmp.lt.s32.totalorder %s11, 5
      %p110 = pnand %p108, %p109
      %p111 = pneg %p110
      // Predicated region
      $region9: #{patch_spatial_attention.3} parent=5 // pred_check
        _
      $region10: #{patch_spatial_attention.3} parent=5 // pred_check_branch
        %113 = sbr.rel (%p110) target = $region12
      $region11: #{patch_spatial_attention.3} parent=5 // pred_region
        %s114 = ssub.s32 %s11, 1
        // Predicated region
        $region13: #{patch_spatial_attention.3} parent=11 // pred_check
          %p115 = pneg %p44
        $region14: #{patch_spatial_attention.3} parent=11 // pred_check_branch
          %117 = sbr.rel (%p115) target = $region16
        $region15: #{patch_spatial_attention.3} parent=11 // pred_region
          _
        $region16: #{patch_spatial_attention.3} parent=11 // pred_fallthru
          _
      $region12: #{patch_spatial_attention.3} parent=5 // pred_fallthru
        _
      %p118 = scmp.lt.s32.totalorder %s11, 4
      // Predicated region
      $region17: #{patch_spatial_attention.3} parent=5 // pred_check
        %p119 = pneg %p118
      $region18: #{patch_spatial_attention.3} parent=5 // pred_check_branch
        %121 = sbr.rel (%p119) target = $region20
      $region19: #{patch_spatial_attention.3} parent=5 // pred_region
        // Predicated region
        $region21: #{patch_spatial_attention.3} parent=19 // pred_check
          %p122 = pneg %p66
        $region22: #{patch_spatial_attention.3} parent=19 // pred_check_branch
          %124 = sbr.rel (%p122) target = $region24
        $region23: #{patch_spatial_attention.3} parent=19 // pred_region
          %s125 = sand.u32 %s56, 1
          %s126 = scalar_lea.sflag [#allocation3], %s125
          %s127 = sand.u32 %s56, 1
          %s128 = smul.addr %s127, 32
          %s129 = scalar_lea.vmem [#allocation2], %s128
          %s131 = ssub.s32 512, 512
          %132 = vsyncadd %s126, %s131
          %s133 = smul.addr %s18, 8
          %s134 = sadd.s32 %s19, %s133
          %s135 = smul.addr %s134, 128
          %s136 = scalar_lea.hbm %s1, %s135
          %s137 = sshll.u32 %s129, 4
          %s138 = int_to_ptr.vmem [resolvable:$true] %s137
          %143 = dma.hbm_to_vmem [thread:$0]  %s136, 512, %s138, %s126, 256, 128, 8
        $region24: #{patch_spatial_attention.3} parent=19 // pred_fallthru
          _
      $region20: #{patch_spatial_attention.3} parent=5 // pred_fallthru
        _
      %p144 = scmp.le.s32.totalorder 1, %s11
      %p145 = scmp.lt.s32.totalorder %s11, 5
      %p146 = pnand %p144, %p145
      %p147 = pneg %p146
      // Predicated region
      $region25: #{patch_spatial_attention.3} parent=5 // pred_check
        _
      $region26: #{patch_spatial_attention.3} parent=5 // pred_check_branch
        %149 = sbr.rel (%p146) target = $region28
      $region27: #{patch_spatial_attention.3} parent=5 // pred_region
        %s150 = ssub.s32 %s11, 1
        %s151 = sand.u32 %s59, 1
        %s152 = scalar_lea.sflag [#allocation3], %s151
        %s153 = sand.u32 %s59, 1
        %s154 = smul.addr %s153, 32
        %s155 = scalar_lea.vmem [#allocation2], %s154
        // Predicated region
        $region29: #{patch_spatial_attention.3} parent=27 // pred_check
          %p156 = pneg %p72
        $region30: #{patch_spatial_attention.3} parent=27 // pred_check_branch
          %158 = sbr.rel (%p156) target = $region32
        $region31: #{patch_spatial_attention.3} parent=27 // pred_region
          %159 = dma.done %s152, 512
        $region32: #{patch_spatial_attention.3} parent=27 // pred_fallthru
          _
        %p160 = pneg %p44
        %p161 = pneg %p41
        %s162 = sand.u32 %s59, 1
        %s163 = scalar_lea.sflag [#allocation3], %s162
        %s164 = sand.u32 %s59, 1
        %s165 = smul.addr %s164, 32
        %s166 = scalar_lea.vmem [#allocation2], %s165
        %p167 = pneg %p72
        %p168 = pneg %p69
        %p169 = pneg %p100
        %p170 = pneg %p97
        %s171 = smul.u32 2, %s21
        %p172 = scmp.lt.s32.totalorder %s20, 1
        %s173 = scalar_select %p172, %s20, 1
        %p174 = scmp.lt.s32.totalorder %s171, 3
        %s175 = scalar_select %p174, %s171, 3
        %s176 = smul.addr %s173, 4
        %s177 = sadd.s32 %s175, %s176
        %s178 = smul.addr %s177, 4
        %s179 = scalar_lea.vmem %s2, %s178
        %s180 = smul.u32 2, %s21
        %p181 = scmp.lt.s32.totalorder %s20, 1
        %s182 = scalar_select %p181, %s20, 1
        %p183 = scmp.lt.s32.totalorder %s180, 3
        %s184 = scalar_select %p183, %s180, 3
        %s185 = smul.addr %s182, 4
        %s186 = sadd.s32 %s184, %s185
        %s187 = smul.addr %s186, 4
        %s188 = scalar_lea.vmem %s2, %s187
        %s189 = smul.u32 2, %s21
        %v190 = vld [vmem:[%s0] sm:$0xff]
        %v191 = vld [vmem:[%s0 + $0x8] sm:$0xff]
        %v192 = vld [vmem:[%s155] sm:$0xf]
        %v193 = vld [vmem:[%s155 + $0x8] sm:$0xf]
        %v194 = vld [vmem:[%s155 + $0x10] sm:$0xf]
        %v195 = vld [vmem:[%s155 + $0x18] sm:$0xf]
        %v200 = vrot.slane %v192, 1
        %v201 = vrot.slane %v193, 1
        %v202 = vrot.slane %v194, 1
        %v203 = vrot.slane %v195, 1
        %v208 = vadd.f32 %v192, %v200
        %v209 = vadd.f32 %v193, %v201
        %v210 = vadd.f32 %v194, %v202
        %v211 = vadd.f32 %v195, %v203
        %v212 = vrot.slane %v192, 2
        %v213 = vrot.slane %v193, 2
        %v214 = vrot.slane %v194, 2
        %v215 = vrot.slane %v195, 2
        %v220 = vadd.f32 %v208, %v212
        %v221 = vadd.f32 %v209, %v213
        %v222 = vadd.f32 %v210, %v214
        %v223 = vadd.f32 %v211, %v215
        %v224 = vrot.slane %v192, 3
        %v225 = vrot.slane %v193, 3
        %v226 = vrot.slane %v194, 3
        %v227 = vrot.slane %v195, 3
        %v232 = vadd.f32 %v220, %v224
        %v233 = vadd.f32 %v221, %v225
        %v234 = vadd.f32 %v222, %v226
        %v235 = vadd.f32 %v223, %v227
        %v240 = vrot.slane %v233, 7
        %vm241 = vcmask 1041409
        %v242 = vsel %vm241, %v240, %v232
        %v243 = vrot.slane %v234, 6
        %vm244 = vcmask 1042434
        %v245 = vsel %vm244, %v243, %v242
        %v246 = vrot.slane %v235, 5
        %vm247 = vcmask 1043459
        %v248 = vsel %vm247, %v246, %v245
        %vm249 = vcmask 130048
        %v250 = vsel %vm249, %v248, 0
        %252 = vmatprep.subr.mxu0 0.0
        %253 = vmatpush1.msra.mxu0 %v190
        %254 = vmatprep.subr.mxu0 0.0
        %255 = vmatpush1.msra.mxu0 %v191
        %256 = vmatprep.subr.mxu0 0.0
        %257 = vmatpush1.msra.mxu0 0.0
        %258 = vmatprep.subr.mxu0 0.0
        %259 = vmatpush1.msra.mxu0 0.0
        %260 = vmatprep.subr.mxu0 0.0
        %261 = vmatpush1.msra.mxu0 0.0
        %262 = vmatprep.subr.mxu0 0.0
        %263 = vmatpush1.msra.mxu0 0.0
        %264 = vmatprep.subr.mxu0 0.0
        %265 = vmatpush1.msra.mxu0 0.0
        %266 = vmatprep.subr.mxu0 0.0
        %267 = vmatpush1.msra.mxu0 0.0
        %268 = vmatprep.subr.mxu0 0.0
        %269 = vmatpush1.msra.mxu0 0.0
        %270 = vmatprep.subr.mxu0 0.0
        %271 = vmatpush1.msra.mxu0 0.0
        %272 = vmatprep.subr.mxu0 0.0
        %273 = vmatpush1.msra.mxu0 0.0
        %274 = vmatprep.subr.mxu0 0.0
        %275 = vmatpush1.msra.mxu0 0.0
        %276 = vmatprep.subr.mxu0 0.0
        %277 = vmatpush1.msra.mxu0 0.0
        %278 = vmatprep.subr.mxu0 0.0
        %279 = vmatpush1.msra.mxu0 0.0
        %280 = vmatprep.subr.mxu0 0.0
        %281 = vmatpush1.msra.mxu0 0.0
        %282 = vmatprep.subr.mxu0 0.0
        %283 = vmatpush1.msra.mxu0 0.0
        %284 = vmatprep.subr.mxu0 0.0
        %285 = vmatpush1.msra.mxu0 0.0
        %286 = vmatprep.subr.mxu0 0.0
        %287 = vmatpush1.msra.mxu0 0.0
        %288 = vmatprep.subr.mxu0 0.0
        %289 = vmatpush1.msra.mxu0 0.0
        %290 = vmatprep.subr.mxu0 0.0
        %291 = vmatpush1.msra.mxu0 0.0
        %292 = vmatprep.subr.mxu0 0.0
        %293 = vmatpush1.msra.mxu0 0.0
        %294 = vmatprep.subr.mxu0 0.0
        %295 = vmatpush1.msra.mxu0 0.0
        %296 = vmatprep.subr.mxu0 0.0
        %297 = vmatpush1.msra.mxu0 0.0
        %298 = vmatprep.subr.mxu0 0.0
        %299 = vmatpush1.msra.mxu0 0.0
        %300 = vmatprep.subr.mxu0 0.0
        %301 = vmatpush1.msra.mxu0 0.0
        %302 = vmatprep.subr.mxu0 0.0
        %303 = vmatpush1.msra.mxu0 0.0
        %304 = vmatprep.subr.mxu0 0.0
        %305 = vmatpush1.msra.mxu0 0.0
        %306 = vmatprep.subr.mxu0 0.0
        %307 = vmatpush1.msra.mxu0 0.0
        %308 = vmatprep.subr.mxu0 0.0
        %309 = vmatpush1.msra.mxu0 0.0
        %310 = vmatprep.subr.mxu0 0.0
        %311 = vmatpush1.msra.mxu0 0.0
        %312 = vmatprep.subr.mxu0 0.0
        %313 = vmatpush1.msra.mxu0 0.0
        %314 = vmatprep.subr.mxu0 0.0
        %315 = vmatpush1.msra.mxu0 0.0
        %316 = vmatprep.mubr.f32.mxu0 0.0
        %317 = vmatmul.mubr.f32.gmra.mrb[0].mxu0 %v250
        %v318 = vpop.f32.mrb[0].mxu0
        %v319 = vadd.f32 0.0, %v318
        %v320 = vpop.f32.mrb[0].mxu0
        %321 = vdwg.mxu0
        %vm322 = vcmask 27648
        %323 = vst.msk [vmem:[%s188] sm:$0xf] %vm322, %v319
        %v324 = vld [vmem:[%s155 + $0x4] sm:$0xf]
        %v325 = vld [vmem:[%s155 + $0xc] sm:$0xf]
        %v326 = vld [vmem:[%s155 + $0x14] sm:$0xf]
        %v327 = vld [vmem:[%s155 + $0x1c] sm:$0xf]
        %v332 = vrot.slane %v324, 1
        %v333 = vrot.slane %v325, 1
        %v334 = vrot.slane %v326, 1
        %v335 = vrot.slane %v327, 1
        %v340 = vadd.f32 %v324, %v332
        %v341 = vadd.f32 %v325, %v333
        %v342 = vadd.f32 %v326, %v334
        %v343 = vadd.f32 %v327, %v335
        %v344 = vrot.slane %v324, 2
        %v345 = vrot.slane %v325, 2
        %v346 = vrot.slane %v326, 2
        %v347 = vrot.slane %v327, 2
        %v352 = vadd.f32 %v340, %v344
        %v353 = vadd.f32 %v341, %v345
        %v354 = vadd.f32 %v342, %v346
        %v355 = vadd.f32 %v343, %v347
        %v356 = vrot.slane %v324, 3
        %v357 = vrot.slane %v325, 3
        %v358 = vrot.slane %v326, 3
        %v359 = vrot.slane %v327, 3
        %v364 = vadd.f32 %v352, %v356
        %v365 = vadd.f32 %v353, %v357
        %v366 = vadd.f32 %v354, %v358
        %v367 = vadd.f32 %v355, %v359
        %v372 = vrot.slane %v365, 7
        %v373 = vsel %vm241, %v372, %v364
        %v374 = vrot.slane %v366, 6
        %v375 = vsel %vm244, %v374, %v373
        %v376 = vrot.slane %v367, 5
        %v377 = vsel %vm247, %v376, %v375
        %v378 = vsel %vm249, %v377, 0
        %380 = vmatprep.subr.mxu0 0.0
        %381 = vmatpush1.msra.mxu0 %v190
        %382 = vmatprep.subr.mxu0 0.0
        %383 = vmatpush1.msra.mxu0 %v191
        %384 = vmatprep.subr.mxu0 0.0
        %385 = vmatpush1.msra.mxu0 0.0
        %386 = vmatprep.subr.mxu0 0.0
        %387 = vmatpush1.msra.mxu0 0.0
        %388 = vmatprep.subr.mxu0 0.0
        %389 = vmatpush1.msra.mxu0 0.0
        %390 = vmatprep.subr.mxu0 0.0
        %391 = vmatpush1.msra.mxu0 0.0
        %392 = vmatprep.subr.mxu0 0.0
        %393 = vmatpush1.msra.mxu0 0.0
        %394 = vmatprep.subr.mxu0 0.0
        %395 = vmatpush1.msra.mxu0 0.0
        %396 = vmatprep.subr.mxu0 0.0
        %397 = vmatpush1.msra.mxu0 0.0
        %398 = vmatprep.subr.mxu0 0.0
        %399 = vmatpush1.msra.mxu0 0.0
        %400 = vmatprep.subr.mxu0 0.0
        %401 = vmatpush1.msra.mxu0 0.0
        %402 = vmatprep.subr.mxu0 0.0
        %403 = vmatpush1.msra.mxu0 0.0
        %404 = vmatprep.subr.mxu0 0.0
        %405 = vmatpush1.msra.mxu0 0.0
        %406 = vmatprep.subr.mxu0 0.0
        %407 = vmatpush1.msra.mxu0 0.0
        %408 = vmatprep.subr.mxu0 0.0
        %409 = vmatpush1.msra.mxu0 0.0
        %410 = vmatprep.subr.mxu0 0.0
        %411 = vmatpush1.msra.mxu0 0.0
        %412 = vmatprep.subr.mxu0 0.0
        %413 = vmatpush1.msra.mxu0 0.0
        %414 = vmatprep.subr.mxu0 0.0
        %415 = vmatpush1.msra.mxu0 0.0
        %416 = vmatprep.subr.mxu0 0.0
        %417 = vmatpush1.msra.mxu0 0.0
        %418 = vmatprep.subr.mxu0 0.0
        %419 = vmatpush1.msra.mxu0 0.0
        %420 = vmatprep.subr.mxu0 0.0
        %421 = vmatpush1.msra.mxu0 0.0
        %422 = vmatprep.subr.mxu0 0.0
        %423 = vmatpush1.msra.mxu0 0.0
        %424 = vmatprep.subr.mxu0 0.0
        %425 = vmatpush1.msra.mxu0 0.0
        %426 = vmatprep.subr.mxu0 0.0
        %427 = vmatpush1.msra.mxu0 0.0
        %428 = vmatprep.subr.mxu0 0.0
        %429 = vmatpush1.msra.mxu0 0.0
        %430 = vmatprep.subr.mxu0 0.0
        %431 = vmatpush1.msra.mxu0 0.0
        %432 = vmatprep.subr.mxu0 0.0
        %433 = vmatpush1.msra.mxu0 0.0
        %434 = vmatprep.subr.mxu0 0.0
        %435 = vmatpush1.msra.mxu0 0.0
        %436 = vmatprep.subr.mxu0 0.0
        %437 = vmatpush1.msra.mxu0 0.0
        %438 = vmatprep.subr.mxu0 0.0
        %439 = vmatpush1.msra.mxu0 0.0
        %440 = vmatprep.subr.mxu0 0.0
        %441 = vmatpush1.msra.mxu0 0.0
        %442 = vmatprep.subr.mxu0 0.0
        %443 = vmatpush1.msra.mxu0 0.0
        %444 = vmatprep.mubr.f32.mxu0 0.0
        %445 = vmatmul.mubr.f32.gmra.mrb[0].mxu0 %v378
        %v446 = vpop.f32.mrb[0].mxu0
        %v447 = vadd.f32 0.0, %v446
        %v448 = vpop.f32.mrb[0].mxu0
        %449 = vdwg.mxu0
        %s450 = scalar_lea.vmem %s188, 4
        %451 = vst.msk [vmem:[%s450] sm:$0xf] %vm322, %v447
        %s452 = smul.u32 2, %s21
        %p453 = scmp.lt.s32.totalorder %s20, 1
        %s454 = scalar_select %p453, %s20, 1
        %p455 = scmp.lt.s32.totalorder %s452, 3
        %s456 = scalar_select %p455, %s452, 3
        %s457 = smul.addr %s454, 4
        %s458 = sadd.s32 %s456, %s457
        %s459 = smul.addr %s458, 4
        %s460 = scalar_lea.vmem %s2, %s459
        // Predicated region
        $region33: #{patch_spatial_attention.3} parent=27 // pred_check
          %p461 = pneg %p97
        $region34: #{patch_spatial_attention.3} parent=27 // pred_check_branch
          %463 = sbr.rel (%p461) target = $region36
        $region35: #{patch_spatial_attention.3} parent=27 // pred_region
          %s464 = smul.u32 2, %s21
        $region36: #{patch_spatial_attention.3} parent=27 // pred_fallthru
          _
      $region28: #{patch_spatial_attention.3} parent=5 // pred_fallthru
        _
      %p465 = scmp.le.s32.totalorder 2, %s11
      // Predicated region
      $region37: #{patch_spatial_attention.3} parent=5 // pred_check
        %p466 = pneg %p465
      $region38: #{patch_spatial_attention.3} parent=5 // pred_check_branch
        %468 = sbr.rel (%p466) target = $region40
      $region39: #{patch_spatial_attention.3} parent=5 // pred_region
        %s469 = ssub.s32 %s11, 2
        // Predicated region
        $region41: #{patch_spatial_attention.3} parent=39 // pred_check
          %p470 = pneg %p103
        $region42: #{patch_spatial_attention.3} parent=39 // pred_check_branch
          %472 = sbr.rel (%p470) target = $region44
        $region43: #{patch_spatial_attention.3} parent=39 // pred_region
          %s473 = smul.u32 2, %s23
          %p474 = scmp.lt.s32.totalorder %s22, 1
          %s475 = scalar_select %p474, %s22, 1
          %p476 = scmp.lt.s32.totalorder %s473, 3
          %s477 = scalar_select %p476, %s473, 3
          %s478 = smul.addr %s475, 4
          %s479 = sadd.s32 %s477, %s478
          %s480 = smul.addr %s479, 4
          %s481 = scalar_lea.vmem %s2, %s480
        $region44: #{patch_spatial_attention.3} parent=39 // pred_fallthru
          _
      $region40: #{patch_spatial_attention.3} parent=5 // pred_fallthru
        _
    $region6: #{patch_spatial_attention.3} parent=1 // loop_footer
      %s15 = sadd.s32 1, %s11
    $region7: #{patch_spatial_attention.3} parent=1 // loop_footer_branch
      %10 = sbr.rel target = $region3
    $region8: #{patch_spatial_attention.3} parent=1 // loop_exit
      _
    %482 = vsyncpa [#allocation3], 1
    %s483 = scalar_lea.sflag [#allocation3], 1
    %484 = vsyncpa %s483, 1

// kernel: patch_spatial_attention.5
$region0: #{patch_spatial_attention.5}
  #allocation0 [shape = 'u32[]', space=smem, size = 0x4, offset = 0x4, fixed_abs, tag = 'smem constant byte address 0x4 - core index']
  #allocation1 [shape = 'u32[144,128]{1,0:T(1,128)}', space=vmem, size = 0x12000, scoped, tag = 'internal scratch']
  %s0 = inlined_call_operand.vmem [shape: f32[4,16], index: 0, kind: input, shape index: {}]
  %s1 = inlined_call_operand.vmem [shape: f32[2,4,4,4], index: 1, kind: input, shape index: {}]
  %s2 = inlined_call_operand.vmem [shape: f32[2,4,16,16], index: 2, kind: input, shape index: {}]
  %s3 = inlined_call_operand.hbm [shape: f32[2,4,16,16], index: 3, kind: output, shape index: {}]
  %s4 = sld [smem:[#allocation0]]
  $region83: #{patch_spatial_attention.5} parent=0
    _
  %s6 = ssub.s32 1, %s4
  %s7 = scalar_select 0, %s6, %s4
  $region1: #{patch_spatial_attention.5} parent=0
    #allocation2 [shape = 'u8[32768]{0}', space=vmem, size = 0x8000, scoped, tag = 'input window, operand 2']
    #allocation3 [shape = 'u8[32768]{0}', space=vmem, size = 0x8000, scoped, tag = 'output window, operand 0']
    #allocation4 [shape = 's32[2]{0}', space=sflag, size = 0x8, scoped, tag = 'scoped memory for patch_spatial_attention.5']
    %8 = vsyncpa [#allocation4], 0
    %s9 = scalar_lea.sflag [#allocation4], 1
    %10 = vsyncpa %s9, 0
    loop: start=0, step=1, limit=6
    $region2: #{patch_spatial_attention.5} parent=1 // loop_pre_header
      _
    $region3: #{patch_spatial_attention.5} parent=1 // loop_header
      %s12 = sphi 0, %s16
      %p13 = scmp.ge.s32.totalorder %s12, 6
      %s19 = sphi 0, %s31
      %s20 = sphi 0, %s27
      %s21 = sphi 0, %s19
      %s22 = sphi 0, %s20
      %s23 = sphi 0, %s21
      %s24 = sphi 0, %s22
      %s32 = sphi 0, %s32
      %s34 = sphi 0, %s32
      %s35 = sphi 0, %s34
      %s49 = sphi 0, %s35
      %s57 = sphi 0, %s59
      %s60 = sphi 0, %s57
      %s61 = sphi 0, %s60
      %s77 = sphi 0, %s61
      %s85 = sphi 0, %s87
      %s88 = sphi 0, %s85
      %s89 = sphi 0, %s88
      %s105 = sphi 0, %s89
      %s113 = sphi 0, %s115
      %s116 = sphi 0, %s113
      %s117 = sphi 0, %s116
      %s133 = sphi 0, %s117
    $region4: #{patch_spatial_attention.5} parent=1 // loop_header_branch
      %15 = sbr.rel (%p13) target = $region8
    $region5: #{patch_spatial_attention.5} parent=1 // loop_body
      %s17 = ssub.s32 %s12, 1
      %s18 = ssub.s32 %s12, 2
      %s25 = sadd.s32 1, %s20
      %p26 = scmp.ge.s32.totalorder %s25, 2
      %s27 = scalar_select %p26, 0, %s25
      %s28 = sadd.s32 1, %s19
      %s29 = scalar_select %p26, %s28, %s19
      %p30 = scmp.ge.s32.totalorder %s29, 2
      %s31 = scalar_select %p30, 0, %s29
      %s33 = sadd.s32 %s32, 1
      %p36 = scmp.eq.s32.totalorder %s12, 3
      %p37 = scmp.ne.s32.totalorder %s32, %s34
      %p38 = scmp.eq.s32.totalorder %s12, 0
      %p39 = por %p37, %p38
      %p40 = scmp.ne.s32.totalorder %s32, %s34
      %p41 = scmp.eq.s32.totalorder %s17, 3
      %p42 = por %p40, %p41
      %p43 = scmp.ne.s32.totalorder %s34, %s35
      %p44 = scmp.eq.s32.totalorder %s17, 0
      %p45 = por %p43, %p44
      %p46 = scmp.ne.s32.totalorder %s34, %s35
      %p47 = scmp.eq.s32.totalorder %s18, 3
      %p48 = por %p46, %p47
      %p50 = scmp.ne.s32.totalorder %s35, %s49
      %p51 = scmp.eq.s32.totalorder %s18, 0
      %p52 = por %p50, %p51
      %s53 = ssub.s32 %s19, %s31
      %s54 = ssub.s32 %s20, %s27
      %s55 = sor.u32 %s53, %s54
      %p56 = scmp.eq.s32.totalorder %s55, 0
      %s58 = sadd.s32 %s57, 1
      %s59 = scalar_select %p56, %s57, %s58
      %p62 = pneg %p56
      %p63 = scmp.eq.s32.totalorder %s12, 3
      %p64 = por %p62, %p63
      %p65 = scmp.ne.s32.totalorder %s57, %s60
      %p66 = scmp.eq.s32.totalorder %s12, 0
      %p67 = por %p65, %p66
      %p68 = scmp.ne.s32.totalorder %s57, %s60
      %p69 = scmp.eq.s32.totalorder %s17, 3
      %p70 = por %p68, %p69
      %p71 = scmp.ne.s32.totalorder %s60, %s61
      %p72 = scmp.eq.s32.totalorder %s17, 0
      %p73 = por %p71, %p72
      %p74 = scmp.ne.s32.totalorder %s60, %s61
      %p75 = scmp.eq.s32.totalorder %s18, 3
      %p76 = por %p74, %p75
      %p78 = scmp.ne.s32.totalorder %s61, %s77
      %p79 = scmp.eq.s32.totalorder %s18, 0
      %p80 = por %p78, %p79
      %s81 = ssub.s32 %s19, %s31
      %s82 = ssub.s32 %s20, %s27
      %s83 = sor.u32 %s81, %s82
      %p84 = scmp.eq.s32.totalorder %s83, 0
      %s86 = sadd.s32 %s85, 1
      %s87 = scalar_select %p84, %s85, %s86
      %p90 = pneg %p84
      %p91 = scmp.eq.s32.totalorder %s12, 3
      %p92 = por %p90, %p91
      %p93 = scmp.ne.s32.totalorder %s85, %s88
      %p94 = scmp.eq.s32.totalorder %s12, 0
      %p95 = por %p93, %p94
      %p96 = scmp.ne.s32.totalorder %s85, %s88
      %p97 = scmp.eq.s32.totalorder %s17, 3
      %p98 = por %p96, %p97
      %p99 = scmp.ne.s32.totalorder %s88, %s89
      %p100 = scmp.eq.s32.totalorder %s17, 0
      %p101 = por %p99, %p100
      %p102 = scmp.ne.s32.totalorder %s88, %s89
      %p103 = scmp.eq.s32.totalorder %s18, 3
      %p104 = por %p102, %p103
      %p106 = scmp.ne.s32.totalorder %s89, %s105
      %p107 = scmp.eq.s32.totalorder %s18, 0
      %p108 = por %p106, %p107
      %s109 = ssub.s32 %s19, %s31
      %s110 = ssub.s32 %s20, %s27
      %s111 = sor.u32 %s109, %s110
      %p112 = scmp.eq.s32.totalorder %s111, 0
      %s114 = sadd.s32 %s113, 1
      %s115 = scalar_select %p112, %s113, %s114
      %p118 = pneg %p112
      %p119 = scmp.eq.s32.totalorder %s12, 3
      %p120 = por %p118, %p119
      %p121 = scmp.ne.s32.totalorder %s113, %s116
      %p122 = scmp.eq.s32.totalorder %s12, 0
      %p123 = por %p121, %p122
      %p124 = scmp.ne.s32.totalorder %s113, %s116
      %p125 = scmp.eq.s32.totalorder %s17, 3
      %p126 = por %p124, %p125
      %p127 = scmp.ne.s32.totalorder %s116, %s117
      %p128 = scmp.eq.s32.totalorder %s17, 0
      %p129 = por %p127, %p128
      %p130 = scmp.ne.s32.totalorder %s116, %s117
      %p131 = scmp.eq.s32.totalorder %s18, 3
      %p132 = por %p130, %p131
      %p134 = scmp.ne.s32.totalorder %s117, %s133
      %p135 = scmp.eq.s32.totalorder %s18, 0
      %p136 = por %p134, %p135
      %p137 = scmp.le.s32.totalorder 1, %s12
      %p138 = scmp.lt.s32.totalorder %s12, 5
      %p139 = pnand %p137, %p138
      %p140 = pneg %p139
      // Predicated region
      $region9: #{patch_spatial_attention.5} parent=5 // pred_check
        _
      $region10: #{patch_spatial_attention.5} parent=5 // pred_check_branch
        %142 = sbr.rel (%p139) target = $region12
      $region11: #{patch_spatial_attention.5} parent=5 // pred_region
        %s143 = ssub.s32 %s12, 1
        // Predicated region
        $region13: #{patch_spatial_attention.5} parent=11 // pred_check
          %p144 = pneg %p45
        $region14: #{patch_spatial_attention.5} parent=11 // pred_check_branch
          %146 = sbr.rel (%p144) target = $region16
        $region15: #{patch_spatial_attention.5} parent=11 // pred_region
          _
        $region16: #{patch_spatial_attention.5} parent=11 // pred_fallthru
          _
      $region12: #{patch_spatial_attention.5} parent=5 // pred_fallthru
        _
      %p147 = scmp.lt.s32.totalorder %s12, 4
      // Predicated region
      $region17: #{patch_spatial_attention.5} parent=5 // pred_check
        %p148 = pneg %p147
      $region18: #{patch_spatial_attention.5} parent=5 // pred_check_branch
        %150 = sbr.rel (%p148) target = $region20
      $region19: #{patch_spatial_attention.5} parent=5 // pred_region
        // Predicated region
        $region21: #{patch_spatial_attention.5} parent=19 // pred_check
          %p151 = pneg %p67
        $region22: #{patch_spatial_attention.5} parent=19 // pred_check_branch
          %153 = sbr.rel (%p151) target = $region24
        $region23: #{patch_spatial_attention.5} parent=19 // pred_region
          %s154 = smul.u32 2, %s20
          %p155 = scmp.lt.s32.totalorder %s19, 1
          %s156 = scalar_select %p155, %s19, 1
          %p157 = scmp.lt.s32.totalorder %s154, 3
          %s158 = scalar_select %p157, %s154, 3
          %s159 = smul.addr %s156, 4
          %s160 = sadd.s32 %s158, %s159
          %s161 = smul.addr %s160, 4
          %s162 = scalar_lea.vmem %s1, %s161
          %s163 = smul.u32 2, %s20
        $region24: #{patch_spatial_attention.5} parent=19 // pred_fallthru
          _
        // Predicated region
        $region25: #{patch_spatial_attention.5} parent=19 // pred_check
          %p164 = pneg %p95
        $region26: #{patch_spatial_attention.5} parent=19 // pred_check_branch
          %166 = sbr.rel (%p164) target = $region28
        $region27: #{patch_spatial_attention.5} parent=19 // pred_region
          %s167 = sand.u32 %s85, 1
          %s168 = sand.u32 %s85, 1
          %s169 = smul.addr %s168, 32
          %s170 = scalar_lea.vmem [#allocation2], %s169
          %s171 = smul.addr %s19, 8
          %s172 = sadd.s32 %s20, %s171
          %s173 = smul.addr %s172, 8
          %s174 = scalar_lea.vmem %s2, %s173
          // Predicated region
          $region29: #{patch_spatial_attention.5} parent=27 // pred_check
            _
          $region30: #{patch_spatial_attention.5} parent=27 // pred_check_branch
            %176 = sbr.rel (0) target = $region32
          $region31: #{patch_spatial_attention.5} parent=27 // pred_region
            // Predicated region
            $region33: #{patch_spatial_attention.5} parent=31 // pred_check
              _
            $region34: #{patch_spatial_attention.5} parent=31 // pred_check_branch
              %178 = sbr.rel (0) target = $region36
            $region35: #{patch_spatial_attention.5} parent=31 // pred_region
              // Predicated region
              $region48: #{patch_spatial_attention.5} parent=35 // pred_check
                _
              $region49: #{patch_spatial_attention.5} parent=35 // pred_check_branch
                %199 = sbr.rel (0) target = $region51
              $region50: #{patch_spatial_attention.5} parent=35 // pred_region
                loop: start=0, step=1, limit=1
                $region52: #{patch_spatial_attention.5} parent=50 // loop_pre_header
                  _
                $region53: #{patch_spatial_attention.5} parent=50 // loop_header
                  %s201 = sphi 0, %s205
                  %p202 = scmp.ge.s32.totalorder %s201, 1
                  %s206 = sphi %s174, %s174
                  %s207 = sphi %s170, %s170
                $region54: #{patch_spatial_attention.5} parent=50 // loop_header_branch
                  %204 = sbr.rel (%p202) target = $region58
                $region55: #{patch_spatial_attention.5} parent=50 // loop_body
                  %v208 = vld [vmem:[%s206] sm:$0xff]
                  %209 = vst [vmem:[%s207] sm:$0xff] %v208
                  %v210 = vld [vmem:[%s206 + $0x10] sm:$0xff]
                  %211 = vst [vmem:[%s207 + $0x8] sm:$0xff] %v210
                  %v212 = vld [vmem:[%s206 + $0x20] sm:$0xff]
                  %213 = vst [vmem:[%s207 + $0x10] sm:$0xff] %v212
                  %v214 = vld [vmem:[%s206 + $0x30] sm:$0xff]
                  %215 = vst [vmem:[%s207 + $0x18] sm:$0xff] %v214
                $region56: #{patch_spatial_attention.5} parent=50 // loop_footer
                  %s205 = sadd.s32 1, %s201
                $region57: #{patch_spatial_attention.5} parent=50 // loop_footer_branch
                  %200 = sbr.rel target = $region53
                $region58: #{patch_spatial_attention.5} parent=50 // loop_exit
                  _
              $region51: #{patch_spatial_attention.5} parent=35 // pred_fallthru
                _
              // Predicated region
              $region59: #{patch_spatial_attention.5} parent=35 // pred_check
                _
              $region60: #{patch_spatial_attention.5} parent=35 // pred_check_branch
                %217 = sbr.rel target = $region62
              $region61: #{patch_spatial_attention.5} parent=35 // pred_region
                _
              $region62: #{patch_spatial_attention.5} parent=35 // pred_fallthru
                _
            $region36: #{patch_spatial_attention.5} parent=31 // pred_fallthru
              _
            // Predicated region
            $region37: #{patch_spatial_attention.5} parent=31 // pred_check
              _
            $region38: #{patch_spatial_attention.5} parent=31 // pred_check_branch
              %180 = sbr.rel target = $region40
            $region39: #{patch_spatial_attention.5} parent=31 // pred_region
              loop: start=0, step=1, limit=1
              $region41: #{patch_spatial_attention.5} parent=39 // loop_pre_header
                _
              $region42: #{patch_spatial_attention.5} parent=39 // loop_header
                %s183 = sphi 0, %s187
                %p184 = scmp.ge.s32.totalorder %s183, 1
                %s188 = sphi %s174, %s174
                %s189 = sphi %s170, %s170
              $region43: #{patch_spatial_attention.5} parent=39 // loop_header_branch
                %186 = sbr.rel (%p184) target = $region47
              $region44: #{patch_spatial_attention.5} parent=39 // loop_body
                %v190 = vld [vmem:[%s188] sm:$0xff]
                %191 = vst [vmem:[%s189] sm:$0xff] %v190
                %v192 = vld [vmem:[%s188 + $0x10] sm:$0xff]
                %193 = vst [vmem:[%s189 + $0x8] sm:$0xff] %v192
                %v194 = vld [vmem:[%s188 + $0x20] sm:$0xff]
                %195 = vst [vmem:[%s189 + $0x10] sm:$0xff] %v194
                %v196 = vld [vmem:[%s188 + $0x30] sm:$0xff]
                %197 = vst [vmem:[%s189 + $0x18] sm:$0xff] %v196
              $region45: #{patch_spatial_attention.5} parent=39 // loop_footer
                %s187 = sadd.s32 1, %s183
              $region46: #{patch_spatial_attention.5} parent=39 // loop_footer_branch
                %182 = sbr.rel target = $region42
              $region47: #{patch_spatial_attention.5} parent=39 // loop_exit
                _
            $region40: #{patch_spatial_attention.5} parent=31 // pred_fallthru
              _
          $region32: #{patch_spatial_attention.5} parent=27 // pred_fallthru
            _
          %218 = vnop
        $region28: #{patch_spatial_attention.5} parent=19 // pred_fallthru
          _
      $region20: #{patch_spatial_attention.5} parent=5 // pred_fallthru
        _
      %p219 = scmp.le.s32.totalorder 1, %s12
      %p220 = scmp.lt.s32.totalorder %s12, 5
      %p221 = pnand %p219, %p220
      %p222 = pneg %p221
      // Predicated region
      $region63: #{patch_spatial_attention.5} parent=5 // pred_check
        _
      $region64: #{patch_spatial_attention.5} parent=5 // pred_check_branch
        %224 = sbr.rel (%p221) target = $region66
      $region65: #{patch_spatial_attention.5} parent=5 // pred_region
        %s225 = ssub.s32 %s12, 1
        %s226 = sand.u32 %s88, 1
        %s227 = sand.u32 %s88, 1
        %s228 = smul.addr %s227, 32
        %s229 = scalar_lea.vmem [#allocation2], %s228
        // Predicated region
        $region67: #{patch_spatial_attention.5} parent=65 // pred_check
          %p230 = pneg %p101
        $region68: #{patch_spatial_attention.5} parent=65 // pred_check_branch
          %232 = sbr.rel (%p230) target = $region70
        $region69: #{patch_spatial_attention.5} parent=65 // pred_region
          _
        $region70: #{patch_spatial_attention.5} parent=65 // pred_fallthru
          _
        %p233 = pneg %p45
        %p234 = pneg %p42
        %s235 = smul.u32 2, %s22
        %p236 = scmp.lt.s32.totalorder %s21, 1
        %s237 = scalar_select %p236, %s21, 1
        %p238 = scmp.lt.s32.totalorder %s235, 3
        %s239 = scalar_select %p238, %s235, 3
        %s240 = smul.addr %s237, 4
        %s241 = sadd.s32 %s239, %s240
        %s242 = smul.addr %s241, 4
        %s243 = scalar_lea.vmem %s1, %s242
        %p244 = pneg %p73
        %p245 = pneg %p70
        %s246 = sand.u32 %s88, 1
        %s247 = sand.u32 %s88, 1
        %s248 = smul.addr %s247, 32
        %s249 = scalar_lea.vmem [#allocation2], %s248
        %p250 = pneg %p101
        %p251 = pneg %p98
        %p252 = pneg %p129
        %p253 = pneg %p126
        %s254 = sand.u32 %s116, 1
        %s255 = scalar_lea.sflag [#allocation4], %s254
        %s256 = sand.u32 %s116, 1
        %s257 = smul.addr %s256, 32
        %s258 = scalar_lea.vmem [#allocation3], %s257
        %s259 = smul.u32 2, %s22
        %p260 = scmp.lt.s32.totalorder %s21, 1
        %s261 = scalar_select %p260, %s21, 1
        %p262 = scmp.lt.s32.totalorder %s259, 3
        %s263 = scalar_select %p262, %s259, 3
        %s264 = smul.addr %s261, 4
        %s265 = sadd.s32 %s263, %s264
        %s266 = smul.addr %s265, 4
        %s267 = scalar_lea.vmem %s1, %s266
        %s268 = smul.u32 2, %s22
        %v269 = vld [vmem:[%s0] sm:$0xf]
        %v270 = vld [vmem:[%s267] sm:$0xf]
        %vm271 = vcmask 31744
        %v273 = vsel %vm271, %v270, 0
        %vm275 = vcmask 1043456
        %v277 = vsel %vm275, %v269, 0
        %279 = vmatprep.subr.mxu0 0.0
        %280 = vmatpush1.msra.mxu0 %v277
        %281 = vmatprep.subr.mxu0 0.0
        %282 = vmatpush1.msra.mxu0 0.0
        %283 = vmatprep.subr.mxu0 0.0
        %284 = vmatpush1.msra.mxu0 0.0
        %285 = vmatprep.subr.mxu0 0.0
        %286 = vmatpush1.msra.mxu0 0.0
        %287 = vmatprep.subr.mxu0 0.0
        %288 = vmatpush1.msra.mxu0 0.0
        %289 = vmatprep.subr.mxu0 0.0
        %290 = vmatpush1.msra.mxu0 0.0
        %291 = vmatprep.subr.mxu0 0.0
        %292 = vmatpush1.msra.mxu0 0.0
        %293 = vmatprep.subr.mxu0 0.0
        %294 = vmatpush1.msra.mxu0 0.0
        %295 = vmatprep.subr.mxu0 0.0
        %296 = vmatpush1.msra.mxu0 0.0
        %297 = vmatprep.subr.mxu0 0.0
        %298 = vmatpush1.msra.mxu0 0.0
        %299 = vmatprep.subr.mxu0 0.0
        %300 = vmatpush1.msra.mxu0 0.0
        %301 = vmatprep.subr.mxu0 0.0
        %302 = vmatpush1.msra.mxu0 0.0
        %303 = vmatprep.subr.mxu0 0.0
        %304 = vmatpush1.msra.mxu0 0.0
        %305 = vmatprep.subr.mxu0 0.0
        %306 = vmatpush1.msra.mxu0 0.0
        %307 = vmatprep.subr.mxu0 0.0
        %308 = vmatpush1.msra.mxu0 0.0
        %309 = vmatprep.subr.mxu0 0.0
        %310 = vmatpush1.msra.mxu0 0.0
        %311 = vmatprep.subr.mxu0 0.0
        %312 = vmatpush1.msra.mxu0 0.0
        %313 = vmatprep.subr.mxu0 0.0
        %314 = vmatpush1.msra.mxu0 0.0
        %315 = vmatprep.subr.mxu0 0.0
        %316 = vmatpush1.msra.mxu0 0.0
        %317 = vmatprep.subr.mxu0 0.0
        %318 = vmatpush1.msra.mxu0 0.0
        %319 = vmatprep.subr.mxu0 0.0
        %320 = vmatpush1.msra.mxu0 0.0
        %321 = vmatprep.subr.mxu0 0.0
        %322 = vmatpush1.msra.mxu0 0.0
        %323 = vmatprep.subr.mxu0 0.0
        %324 = vmatpush1.msra.mxu0 0.0
        %325 = vmatprep.subr.mxu0 0.0
        %326 = vmatpush1.msra.mxu0 0.0
        %327 = vmatprep.subr.mxu0 0.0
        %328 = vmatpush1.msra.mxu0 0.0
        %329 = vmatprep.subr.mxu0 0.0
        %330 = vmatpush1.msra.mxu0 0.0
        %331 = vmatprep.subr.mxu0 0.0
        %332 = vmatpush1.msra.mxu0 0.0
        %333 = vmatprep.subr.mxu0 0.0
        %334 = vmatpush1.msra.mxu0 0.0
        %335 = vmatprep.subr.mxu0 0.0
        %336 = vmatpush1.msra.mxu0 0.0
        %337 = vmatprep.subr.mxu0 0.0
        %338 = vmatpush1.msra.mxu0 0.0
        %339 = vmatprep.subr.mxu0 0.0
        %340 = vmatpush1.msra.mxu0 0.0
        %341 = vmatprep.subr.mxu0 0.0
        %342 = vmatpush1.msra.mxu0 0.0
        %343 = vmatprep.mubr.f32.mxu0 0.0
        %344 = vmatmul.mubr.f32.gmra.mrb[0].mxu0 %v273
        %v345 = vpop.f32.mrb[0].mxu0
        %v346 = vadd.f32 0.0, %v345
        %v347 = vpop.f32.mrb[0].mxu0
        %348 = vdwg.mxu0
        %v349 = vld [vmem:[%s229] sm:$0xf]
        %v350 = vld [vmem:[%s229 + $0x8] sm:$0xf]
        %v351 = vld [vmem:[%s229 + $0x10] sm:$0xf]
        %v352 = vld [vmem:[%s229 + $0x18] sm:$0xf]
        %v355 = vunpack.c.l.s4 1966171168
        %v356 = vunpack.c.0.s8 %v355
        %v357 = vlaneseq
        %v358 = vshrl.u32 %v357, 7
        %v359 = vsub.s32 %v356, %v358
        %v360 = vrot.slane %v346, %v359
        %v361 = vcombine.high %v360, %v360
        %v363 = vunpack.c.l.s4 1966171168
        %v364 = vunpack.c.0.s8 %v363
        %v365 = vlaneseq
        %v366 = vshrl.u32 %v365, 7
        %v367 = vsub.s32 %v364, %v366
        %v368 = vrot.slane %v360, %v367
        %v370 = vunpack.c.l.s4 1966171168
        %v371 = vunpack.c.0.s8 %v370
        %v372 = vlaneseq
        %v373 = vshrl.u32 %v372, 7
        %v374 = vsub.s32 %v371, %v373
        %v375 = vrot.slane %v361, %v374
        %v376 = vcombine.high %v368, %v368
        %v377 = vcombine.high %v375, %v375
        %v378 = vlaneseq
        %v379 = vshrl.u32 %v378, 7
        %v380 = vsub.s32 0, %v379
        %v381 = vrot.slane %v368, %v380
        %v382 = vlaneseq
        %v383 = vshrl.u32 %v382, 7
        %v384 = vsub.s32 0, %v383
        %v385 = vrot.slane %v375, %v384
        %v386 = vlaneseq
        %v387 = vshrl.u32 %v386, 7
        %v388 = vsub.s32 0, %v387
        %v389 = vrot.slane %v376, %v388
        %v390 = vlaneseq
        %v391 = vshrl.u32 %v390, 7
        %v392 = vsub.s32 0, %v391
        %v393 = vrot.slane %v377, %v392
        %v398 = vmul.f32 %v349, %v381
        %v399 = vmul.f32 %v350, %v385
        %v400 = vmul.f32 %v351, %v389
        %v401 = vmul.f32 %v352, %v393
        %vm402 = vcmask 125952
        %403 = vst.msk [vmem:[%s258] sm:$0xf] %vm402, %v398
        %404 = vst.msk [vmem:[%s258 + $0x8] sm:$0xf] %vm402, %v399
        %405 = vst.msk [vmem:[%s258 + $0x10] sm:$0xf] %vm402, %v400
        %406 = vst.msk [vmem:[%s258 + $0x18] sm:$0xf] %vm402, %v401
        %s407 = scalar_lea.vmem %s267, 4
        %v408 = vld [vmem:[%s407] sm:$0xf]
        %v410 = vsel %vm271, %v408, 0
        %412 = vmatprep.subr.mxu0 0.0
        %413 = vmatpush1.msra.mxu0 %v277
        %414 = vmatprep.subr.mxu0 0.0
        %415 = vmatpush1.msra.mxu0 0.0
        %416 = vmatprep.subr.mxu0 0.0
        %417 = vmatpush1.msra.mxu0 0.0
        %418 = vmatprep.subr.mxu0 0.0
        %419 = vmatpush1.msra.mxu0 0.0
        %420 = vmatprep.subr.mxu0 0.0
        %421 = vmatpush1.msra.mxu0 0.0
        %422 = vmatprep.subr.mxu0 0.0
        %423 = vmatpush1.msra.mxu0 0.0
        %424 = vmatprep.subr.mxu0 0.0
        %425 = vmatpush1.msra.mxu0 0.0
        %426 = vmatprep.subr.mxu0 0.0
        %427 = vmatpush1.msra.mxu0 0.0
        %428 = vmatprep.subr.mxu0 0.0
        %429 = vmatpush1.msra.mxu0 0.0
        %430 = vmatprep.subr.mxu0 0.0
        %431 = vmatpush1.msra.mxu0 0.0
        %432 = vmatprep.subr.mxu0 0.0
        %433 = vmatpush1.msra.mxu0 0.0
        %434 = vmatprep.subr.mxu0 0.0
        %435 = vmatpush1.msra.mxu0 0.0
        %436 = vmatprep.subr.mxu0 0.0
        %437 = vmatpush1.msra.mxu0 0.0
        %438 = vmatprep.subr.mxu0 0.0
        %439 = vmatpush1.msra.mxu0 0.0
        %440 = vmatprep.subr.mxu0 0.0
        %441 = vmatpush1.msra.mxu0 0.0
        %442 = vmatprep.subr.mxu0 0.0
        %443 = vmatpush1.msra.mxu0 0.0
        %444 = vmatprep.subr.mxu0 0.0
        %445 = vmatpush1.msra.mxu0 0.0
        %446 = vmatprep.subr.mxu0 0.0
        %447 = vmatpush1.msra.mxu0 0.0
        %448 = vmatprep.subr.mxu0 0.0
        %449 = vmatpush1.msra.mxu0 0.0
        %450 = vmatprep.subr.mxu0 0.0
        %451 = vmatpush1.msra.mxu0 0.0
        %452 = vmatprep.subr.mxu0 0.0
        %453 = vmatpush1.msra.mxu0 0.0
        %454 = vmatprep.subr.mxu0 0.0
        %455 = vmatpush1.msra.mxu0 0.0
        %456 = vmatprep.subr.mxu0 0.0
        %457 = vmatpush1.msra.mxu0 0.0
        %458 = vmatprep.subr.mxu0 0.0
        %459 = vmatpush1.msra.mxu0 0.0
        %460 = vmatprep.subr.mxu0 0.0
        %461 = vmatpush1.msra.mxu0 0.0
        %462 = vmatprep.subr.mxu0 0.0
        %463 = vmatpush1.msra.mxu0 0.0
        %464 = vmatprep.subr.mxu0 0.0
        %465 = vmatpush1.msra.mxu0 0.0
        %466 = vmatprep.subr.mxu0 0.0
        %467 = vmatpush1.msra.mxu0 0.0
        %468 = vmatprep.subr.mxu0 0.0
        %469 = vmatpush1.msra.mxu0 0.0
        %470 = vmatprep.subr.mxu0 0.0
        %471 = vmatpush1.msra.mxu0 0.0
        %472 = vmatprep.subr.mxu0 0.0
        %473 = vmatpush1.msra.mxu0 0.0
        %474 = vmatprep.subr.mxu0 0.0
        %475 = vmatpush1.msra.mxu0 0.0
        %476 = vmatprep.mubr.f32.mxu0 0.0
        %477 = vmatmul.mubr.f32.gmra.mrb[0].mxu0 %v410
        %v478 = vpop.f32.mrb[0].mxu0
        %v479 = vadd.f32 0.0, %v478
        %v480 = vpop.f32.mrb[0].mxu0
        %481 = vdwg.mxu0
        %v482 = vld [vmem:[%s229 + $0x4] sm:$0xf]
        %v483 = vld [vmem:[%s229 + $0xc] sm:$0xf]
        %v484 = vld [vmem:[%s229 + $0x14] sm:$0xf]
        %v485 = vld [vmem:[%s229 + $0x1c] sm:$0xf]
        %v488 = vunpack.c.l.s4 1966171168
        %v489 = vunpack.c.0.s8 %v488
        %v490 = vlaneseq
        %v491 = vshrl.u32 %v490, 7
        %v492 = vsub.s32 %v489, %v491
        %v493 = vrot.slane %v479, %v492
        %v494 = vcombine.high %v493, %v493
        %v496 = vunpack.c.l.s4 1966171168
        %v497 = vunpack.c.0.s8 %v496
        %v498 = vlaneseq
        %v499 = vshrl.u32 %v498, 7
        %v500 = vsub.s32 %v497, %v499
        %v501 = vrot.slane %v493, %v500
        %v503 = vunpack.c.l.s4 1966171168
        %v504 = vunpack.c.0.s8 %v503
        %v505 = vlaneseq
        %v506 = vshrl.u32 %v505, 7
        %v507 = vsub.s32 %v504, %v506
        %v508 = vrot.slane %v494, %v507
        %v509 = vcombine.high %v501, %v501
        %v510 = vcombine.high %v508, %v508
        %v511 = vlaneseq
        %v512 = vshrl.u32 %v511, 7
        %v513 = vsub.s32 0, %v512
        %v514 = vrot.slane %v501, %v513
        %v515 = vlaneseq
        %v516 = vshrl.u32 %v515, 7
        %v517 = vsub.s32 0, %v516
        %v518 = vrot.slane %v508, %v517
        %v519 = vlaneseq
        %v520 = vshrl.u32 %v519, 7
        %v521 = vsub.s32 0, %v520
        %v522 = vrot.slane %v509, %v521
        %v523 = vlaneseq
        %v524 = vshrl.u32 %v523, 7
        %v525 = vsub.s32 0, %v524
        %v526 = vrot.slane %v510, %v525
        %v531 = vmul.f32 %v482, %v514
        %v532 = vmul.f32 %v483, %v518
        %v533 = vmul.f32 %v484, %v522
        %v534 = vmul.f32 %v485, %v526
        %535 = vst.msk [vmem:[%s258 + $0x4] sm:$0xf] %vm402, %v531
        %536 = vst.msk [vmem:[%s258 + $0xc] sm:$0xf] %vm402, %v532
        %537 = vst.msk [vmem:[%s258 + $0x14] sm:$0xf] %vm402, %v533
        %538 = vst.msk [vmem:[%s258 + $0x1c] sm:$0xf] %vm402, %v534
        %s539 = sand.u32 %s116, 1
        %s540 = scalar_lea.sflag [#allocation4], %s539
        %s541 = sand.u32 %s116, 1
        %s542 = smul.addr %s541, 32
        %s543 = scalar_lea.vmem [#allocation3], %s542
        // Predicated region
        $region71: #{patch_spatial_attention.5} parent=65 // pred_check
          %p544 = pneg %p126
        $region72: #{patch_spatial_attention.5} parent=65 // pred_check_branch
          %546 = sbr.rel (%p544) target = $region74
        $region73: #{patch_spatial_attention.5} parent=65 // pred_region
          %s548 = ssub.s32 512, 512
          %549 = vsyncadd %s540, %s548
          %s550 = smul.addr %s21, 8
          %s551 = sadd.s32 %s22, %s550
          %s552 = smul.addr %s551, 128
          %s553 = scalar_lea.hbm %s3, %s552
          %s554 = sshll.u32 %s543, 4
          %s555 = int_to_ptr.vmem [resolvable:$true] %s554
          %560 = dma.vmem_to_hbm [thread:$0]  %s555, 512, %s553, %s540, 128, 256, 8
        $region74: #{patch_spatial_attention.5} parent=65 // pred_fallthru
          _
      $region66: #{patch_spatial_attention.5} parent=5 // pred_fallthru
        _
      %p561 = scmp.le.s32.totalorder 2, %s12
      // Predicated region
      $region75: #{patch_spatial_attention.5} parent=5 // pred_check
        %p562 = pneg %p561
      $region76: #{patch_spatial_attention.5} parent=5 // pred_check_branch
        %564 = sbr.rel (%p562) target = $region78
      $region77: #{patch_spatial_attention.5} parent=5 // pred_region
        %s565 = ssub.s32 %s12, 2
        // Predicated region
        $region79: #{patch_spatial_attention.5} parent=77 // pred_check
          %p566 = pneg %p132
        $region80: #{patch_spatial_attention.5} parent=77 // pred_check_branch
          %568 = sbr.rel (%p566) target = $region82
        $region81: #{patch_spatial_attention.5} parent=77 // pred_region
          %s569 = sand.u32 %s117, 1
          %s570 = scalar_lea.sflag [#allocation4], %s569
          %s571 = sand.u32 %s117, 1
          %s572 = smul.addr %s571, 32
          %s573 = scalar_lea.vmem [#allocation3], %s572
          %574 = dma.done %s570, 512
        $region82: #{patch_spatial_attention.5} parent=77 // pred_fallthru
          _
      $region78: #{patch_spatial_attention.5} parent=5 // pred_fallthru
        _
    $region6: #{patch_spatial_attention.5} parent=1 // loop_footer
      %s16 = sadd.s32 1, %s12
    $region7: #{patch_spatial_attention.5} parent=1 // loop_footer_branch
      %11 = sbr.rel target = $region3
    $region8: #{patch_spatial_attention.5} parent=1 // loop_exit
      _
    %575 = vsyncpa [#allocation4], 1
    %s576 = scalar_lea.sflag [#allocation4], 1
    %577 = vsyncpa %s576, 1

</llo_original>
